<compile_context>
chip_gen: v5e
topology: v5e:2x2
jax: 0.10.0
libtpu: 0.0.40
codegen_flags: <defaults>
</compile_context>

<pallas_src>
import math
import functools

import jax
import jax.numpy as jnp
from jax.experimental import pallas as pl
from jax.experimental.pallas import tpu as pltpu


# ----------------------------- configuration ------------------------------
DIM_IN = 4
DIM_HIDDEN = 32
NUM_HEADS = 4
NUM_INDS = 8
HEAD_DIM = DIM_HIDDEN // NUM_HEADS

B = 2
N = 16

# The packed-slab layout relies on the head-stacked query block having exactly
# DIM_HIDDEN rows for this configuration.
assert NUM_HEADS * NUM_INDS == DIM_HIDDEN
assert DIM_IN + 1 <= DIM_HIDDEN


# ------------------------------ Pallas kernel ------------------------------
def _softmax_lanes(s):
    """Row-wise softmax over the last (lane) axis; reciprocal on the EUP."""
    m = jnp.max(s, axis=-1, keepdims=True)
    e = jnp.exp(s - m)
    return e * pl.reciprocal(jnp.sum(e, axis=-1, keepdims=True), approx=False)


def _isab_kernel(x_ref, wx_ref, wp_ref, bp_ref, out_ref, *,
                 batch, seq, dim, num_heads, head_dim, num_inds):
    nh, hd, m = num_heads, head_dim, num_inds

    # Per-head lane masks, built once from an iota and reused everywhere.
    lane = jax.lax.broadcasted_iota(jnp.int32, (1, 1, dim), 2)
    masks = [jnp.logical_and(lane >= h * hd, lane < (h + 1) * hd)
             .astype(jnp.float32) for h in range(nh)]

    wp = wp_ref[...]                      # (D, 4D): [Q1-stack | Wo1@[Wk2|Wv2] | Wo2]
    bp = bp_ref[...]                      # (1, 3D): [bK2|bV2 | bO2]

    # ---- fused X-side projections: K1 | V1 | Q2 in one MXU push ------------
    # fc0, the biases (homogeneous lane DIM_IN) and the 1/sqrt(hd) scale (Q2)
    # are already folded into wx by the wrapper.
    x2 = x_ref[...].reshape(batch * seq, dim)                         # (B*N, D)
    y = jnp.dot(x2, wx_ref[...], preferred_element_type=jnp.float32)  # (B*N, 3D)
    k1 = y[:, 0:dim].reshape(batch, seq, dim)
    v1 = y[:, dim:2 * dim].reshape(batch, seq, dim)
    q2 = y[:, 2 * dim:3 * dim].reshape(batch, seq, dim)

    # ---- MAB1: inducing points attend to H ----------------------------------
    # Precomputed queries arrive head-stacked along sublanes (row h*M+q holds
    # head h's lanes of query q, zeros elsewhere), so one batched matmul
    # against the flat K1 yields every head's scores and the softmax runs once
    # over the merged (B, H*M, N) tensor.
    q1 = wp[:, 0:dim]                                                 # (H*M, D)
    q1b = jnp.broadcast_to(q1[None], (batch, nh * m, dim))
    s1 = jnp.einsum('bqd,bkd->bqk', q1b, k1,
                    preferred_element_type=jnp.float32)               # (B, H*M, N)
    p1 = _softmax_lanes(s1)
    t1 = jnp.einsum('bqk,bkd->bqd', p1, v1,
                    preferred_element_type=jnp.float32)               # (B, H*M, D)
    # Re-pack head-stacked rows into the flat (B, M, D) head-concat layout.
    o1 = t1[:, 0:m, :] * masks[0]
    for h in range(1, nh):
        o1 = o1 + t1[:, h * m:(h + 1) * m, :] * masks[h]              # (B, M, D)

    # ---- H1 -> K2|V2 with Wo1 folded in (H1 never materialized) -------------
    kv2 = jnp.dot(o1.reshape(batch * m, dim), wp[:, dim:3 * dim],
                  preferred_element_type=jnp.float32) + bp[:, 0:2 * dim]
    k2 = kv2[:, 0:dim].reshape(batch, m, dim)
    v2 = kv2[:, dim:2 * dim].reshape(batch, m, dim)

    # ---- MAB2: H queries attend to H1 ---------------------------------------
    q2s = jnp.concatenate([q2 * masks[h] for h in range(nh)], axis=1)  # (B, H*N, D)
    s2 = jnp.einsum('bqd,bkd->bqk', q2s, k2,
                    preferred_element_type=jnp.float32)                # (B, H*N, M)
    p2 = _softmax_lanes(s2)
    t2 = jnp.einsum('bqk,bkd->bqd', p2, v2,
                    preferred_element_type=jnp.float32)                # (B, H*N, D)
    o2 = t2[:, 0:seq, :] * masks[0]
    for h in range(1, nh):
        o2 = o2 + t2[:, h * seq:(h + 1) * seq, :] * masks[h]           # (B, N, D)

    h2 = jnp.dot(o2.reshape(batch * seq, dim), wp[:, 3 * dim:4 * dim],
                 preferred_element_type=jnp.float32) + bp[:, 2 * dim:3 * dim]
    out_ref[...] = h2.reshape(batch, seq, dim)


# ------------------------------ host wrapper --------------------------------
def _pack_params(params):
    """Algebraically pre-fuse all parameters into lane-major slabs (XLA-side)."""
    d, hd, nh, m = DIM_HIDDEN, HEAD_DIM, NUM_HEADS, NUM_INDS
    scale = 1.0 / math.sqrt(hd)
    f32 = lambda a: jnp.asarray(a, jnp.float32)

    fc0_w, fc0_b = f32(params["fc0_w"]), f32(params["fc0_b"])
    ind = f32(params["inducing"])
    w1, b1 = f32(params["mab1_w"]), f32(params["mab1_b"])
    w2, b2 = f32(params["mab2_w"]), f32(params["mab2_b"])
    wq1, wk1, wv1, wo1 = w1[0], w1[1], w1[2], w1[3]
    bq1, bk1, bv1, bo1 = b1[0], b1[1], b1[2], b1[3]
    wq2, wk2, wv2, wo2 = w2[0], w2[1], w2[2], w2[3]
    bq2, bk2, bv2, bo2 = b2[0], b2[1], b2[2], b2[3]

    # fc0 folded into the X-side projections; biases ride the homogeneous lane
    # (row DIM_IN of the packed weight); attention scale folded into Q2.
    wk1x, bk1x = fc0_w @ wk1, fc0_b @ wk1 + bk1
    wv1x, bv1x = fc0_w @ wv1, fc0_b @ wv1 + bv1
    wq2x, bq2x = (fc0_w @ wq2) * scale, (fc0_b @ wq2 + bq2) * scale
    w_x = jnp.zeros((d, 3 * d), jnp.float32)
    w_x = w_x.at[:DIM_IN, :].set(jnp.concatenate([wk1x, wv1x, wq2x], axis=1))
    w_x = w_x.at[DIM_IN, :].set(jnp.concatenate([bk1x, bv1x, bq2x], axis=0))

    # MAB1 queries are parameter-only: project the inducing points here, fold
    # the scale, and head-stack along rows with non-head lanes zeroed.
    q1 = (ind @ wq1 + bq1) * scale                                 # (M, D)
    head_mask = (jnp.arange(d)[None, :] // hd) == jnp.arange(nh)[:, None]
    q1_stack = jnp.concatenate(
        [jnp.where(head_mask[h][None, :], q1, 0.0) for h in range(nh)],
        axis=0)                                                    # (H*M, D)

    # Wo1 folded into MAB2's K/V projection: K2|V2 = O1 @ (Wo1@[Wk2|Wv2]) + b.
    wkv2 = jnp.concatenate([wk2, wv2], axis=1)                     # (D, 2D)
    w_o1kv2 = wo1 @ wkv2                                           # (D, 2D)
    b_kv2 = bo1 @ wkv2 + jnp.concatenate([bk2, bv2], axis=0)       # (2D,)

    w_pack = jnp.concatenate([q1_stack, w_o1kv2, wo2], axis=1)     # (D, 4D)
    b_pack = jnp.concatenate([b_kv2, bo2], axis=0)[None, :]        # (1, 3D)
    return w_x, w_pack, b_pack


def _pad_x(x):
    """Zero-pad features to D and add the homogeneous 1.0 at lane DIM_IN."""
    bt, n, d_in = x.shape
    ones = jnp.ones((bt, n, 1), jnp.float32)
    zeros = jnp.zeros((bt, n, DIM_HIDDEN - d_in - 1), jnp.float32)
    return jnp.concatenate([x.astype(jnp.float32), ones, zeros], axis=-1)


def isab_forward(x, params):
    """x: (B, N, dim_in) float32 -> (B, N, dim_hidden) float32."""
    bt, n, _ = x.shape
    d = DIM_HIDDEN

    w_x, w_pack, b_pack = _pack_params(params)
    x_pad = _pad_x(x)                                              # (B, N, D)

    kernel = functools.partial(
        _isab_kernel, batch=bt, seq=n, dim=d,
        num_heads=NUM_HEADS, head_dim=HEAD_DIM, num_inds=NUM_INDS)

    return pl.pallas_call(
        kernel,
        out_shape=jax.ShapeDtypeStruct((bt, n, d), jnp.float32),
        grid_spec=pltpu.PrefetchScalarGridSpec(
            num_scalar_prefetch=0,
            grid=(1,),                        # single invocation on every chip
            in_specs=[
                pl.BlockSpec((bt, n, d), lambda i: (0, 0, 0)),     # X (padded)
                pl.BlockSpec((d, 3 * d), lambda i: (0, 0)),        # w_x
                pl.BlockSpec((d, 4 * d), lambda i: (0, 0)),        # w_pack
                pl.BlockSpec((1, 3 * d), lambda i: (0, 0)),        # b_pack
            ],
            out_specs=pl.BlockSpec((bt, n, d), lambda i: (0, 0, 0)),
        ),
        compiler_params=pltpu.CompilerParams(
            dimension_semantics=("arbitrary",)),
    )(x_pad, w_x, w_pack, b_pack)


# ------------------------- pure-JAX reference ------------------------------
def _mha_ref(query, key, value, w, b):
    q = query @ w[0] + b[0]
    k = key @ w[1] + b[1]
    v = value @ w[2] + b[2]

    def split(t):
        bq, s, _ = t.shape
        return t.reshape(bq, s, NUM_HEADS, HEAD_DIM).transpose(0, 2, 1, 3)

    qh, kh, vh = split(q), split(k), split(v)
    attn = jnp.einsum("bhqd,bhkd->bhqk", qh, kh) / math.sqrt(HEAD_DIM)
    attn = jax.nn.softmax(attn, axis=-1)
    o = jnp.einsum("bhqk,bhkd->bhqd", attn, vh)
    o = o.transpose(0, 2, 1, 3).reshape(query.shape[0], query.shape[1], -1)
    return o @ w[3] + b[3]


def isab_ref(x, params):
    h = x @ params["fc0_w"] + params["fc0_b"]
    ind = jnp.broadcast_to(params["inducing"][None],
                           (x.shape[0], NUM_INDS, DIM_HIDDEN))
    h1 = _mha_ref(ind, h, h, params["mab1_w"], params["mab1_b"])
    h2 = _mha_ref(h, h1, h1, params["mab2_w"], params["mab2_b"])
    return h2


# --------------------------------- main ------------------------------------
def make_params(key):
    ks = jax.random.split(key, 7)
    d, d_in = DIM_HIDDEN, DIM_IN
    return {
        "inducing": jax.random.normal(ks[0], (NUM_INDS, d), jnp.float32),
        "fc0_w": jax.random.normal(ks[1], (d_in, d), jnp.float32) * 0.2,
        "fc0_b": jax.random.normal(ks[2], (d,), jnp.float32) * 0.05,
        "mab1_w": jax.random.normal(ks[3], (4, d, d), jnp.float32) * 0.1,
        "mab1_b": jax.random.normal(ks[4], (4, d), jnp.float32) * 0.05,
        "mab2_w": jax.random.normal(ks[5], (4, d, d), jnp.float32) * 0.1,
        "mab2_b": jax.random.normal(ks[6], (4, d), jnp.float32) * 0.05,
    }


if __name__ == "__main__":
    key = jax.random.PRNGKey(0)
    kx, kp = jax.random.split(key)

    x = jax.random.normal(kx, (B, N, DIM_IN), jnp.float32)
    params = make_params(kp)

    out = jax.jit(isab_forward)(x, params)
    out = jax.block_until_ready(out)

    ref = isab_ref(x, params)
    assert out.shape == (B, N, DIM_HIDDEN), out.shape
    # Tolerance accounts for MXU f32 matmul precision and the fp
    # re-association introduced by the wrapper-side weight fusions.
    err = float(jnp.max(jnp.abs(out - ref)))
    assert err < 5e-3, err

    print("KERNEL_OK")
</pallas_src>

<mosaic_0001>
module attributes {stable_mosaic.version = 11 : i64} {
  func.func @_isab_kernel(%arg0: i32, %arg1: memref<2x16x32xf32, #tpu.memory_space<vmem>>, %arg2: memref<32x96xf32, #tpu.memory_space<vmem>>, %arg3: memref<32x128xf32, #tpu.memory_space<vmem>>, %arg4: memref<1x96xf32, #tpu.memory_space<vmem>>, %arg5: memref<2x16x32xf32, #tpu.memory_space<vmem>>) attributes {dimension_semantics = [#tpu.dimension_semantics<arbitrary>], iteration_bounds = array<i64: 1>, scalar_prefetch = 0 : i64, scratch_operands = 0 : i64, tpu.core_type = #tpu.core_type<tc>, window_params = [{pipeline_mode = #tpu.pipeline_mode<synchronous>, transform_indices = @transform_0, window_bounds = array<i64: 2, 16, 32>}, {pipeline_mode = #tpu.pipeline_mode<synchronous>, transform_indices = @transform_1, window_bounds = array<i64: 32, 96>}, {pipeline_mode = #tpu.pipeline_mode<synchronous>, transform_indices = @transform_2, window_bounds = array<i64: 32, 128>}, {pipeline_mode = #tpu.pipeline_mode<synchronous>, transform_indices = @transform_3, window_bounds = array<i64: 1, 96>}, {pipeline_mode = #tpu.pipeline_mode<synchronous>, transform_indices = @transform_4, window_bounds = array<i64: 2, 16, 32>}]} {
    %0 = tpu.iota {dimensions = array<i32: 2>} : vector<1x1x32xi32>
    %c0_i32 = arith.constant 0 : i32
    %1 = vector.broadcast %c0_i32 : i32 to vector<1x1x32xi32>
    %2 = arith.cmpi sge, %0, %1 : vector<1x1x32xi32>
    %c8_i32 = arith.constant 8 : i32
    %3 = vector.broadcast %c8_i32 : i32 to vector<1x1x32xi32>
    %4 = arith.cmpi slt, %0, %3 : vector<1x1x32xi32>
    %5 = arith.andi %2, %4 : vector<1x1x32xi1>
    %6 = arith.extui %5 : vector<1x1x32xi1> to vector<1x1x32xi32>
    %7 = arith.sitofp %6 : vector<1x1x32xi32> to vector<1x1x32xf32>
    %c8_i32_0 = arith.constant 8 : i32
    %8 = vector.broadcast %c8_i32_0 : i32 to vector<1x1x32xi32>
    %9 = arith.cmpi sge, %0, %8 : vector<1x1x32xi32>
    %c16_i32 = arith.constant 16 : i32
    %10 = vector.broadcast %c16_i32 : i32 to vector<1x1x32xi32>
    %11 = arith.cmpi slt, %0, %10 : vector<1x1x32xi32>
    %12 = arith.andi %9, %11 : vector<1x1x32xi1>
    %13 = arith.extui %12 : vector<1x1x32xi1> to vector<1x1x32xi32>
    %14 = arith.sitofp %13 : vector<1x1x32xi32> to vector<1x1x32xf32>
    %c16_i32_1 = arith.constant 16 : i32
    %15 = vector.broadcast %c16_i32_1 : i32 to vector<1x1x32xi32>
    %16 = arith.cmpi sge, %0, %15 : vector<1x1x32xi32>
    %c24_i32 = arith.constant 24 : i32
    %17 = vector.broadcast %c24_i32 : i32 to vector<1x1x32xi32>
    %18 = arith.cmpi slt, %0, %17 : vector<1x1x32xi32>
    %19 = arith.andi %16, %18 : vector<1x1x32xi1>
    %20 = arith.extui %19 : vector<1x1x32xi1> to vector<1x1x32xi32>
    %21 = arith.sitofp %20 : vector<1x1x32xi32> to vector<1x1x32xf32>
    %c24_i32_2 = arith.constant 24 : i32
    %22 = vector.broadcast %c24_i32_2 : i32 to vector<1x1x32xi32>
    %23 = arith.cmpi sge, %0, %22 : vector<1x1x32xi32>
    %c32_i32 = arith.constant 32 : i32
    %24 = vector.broadcast %c32_i32 : i32 to vector<1x1x32xi32>
    %25 = arith.cmpi slt, %0, %24 : vector<1x1x32xi32>
    %26 = arith.andi %23, %25 : vector<1x1x32xi1>
    %27 = arith.extui %26 : vector<1x1x32xi1> to vector<1x1x32xi32>
    %28 = arith.sitofp %27 : vector<1x1x32xi32> to vector<1x1x32xf32>
    %c0 = arith.constant 0 : index
    %c0_3 = arith.constant 0 : index
    %29 = vector.load %arg3[%c0, %c0_3] : memref<32x128xf32, #tpu.memory_space<vmem>>, vector<32x128xf32>
    %c0_4 = arith.constant 0 : index
    %c0_5 = arith.constant 0 : index
    %30 = vector.load %arg4[%c0_4, %c0_5] : memref<1x96xf32, #tpu.memory_space<vmem>>, vector<1x96xf32>
    %c0_6 = arith.constant 0 : index
    %c0_7 = arith.constant 0 : index
    %c0_8 = arith.constant 0 : index
    %31 = vector.load %arg1[%c0_6, %c0_7, %c0_8] : memref<2x16x32xf32, #tpu.memory_space<vmem>>, vector<2x16x32xf32>
    %32 = vector.shape_cast %31 : vector<2x16x32xf32> to vector<32x32xf32>
    %c0_9 = arith.constant 0 : index
    %c0_10 = arith.constant 0 : index
    %33 = vector.load %arg2[%c0_9, %c0_10] : memref<32x96xf32, #tpu.memory_space<vmem>>, vector<32x96xf32>
    %cst = arith.constant dense<0.000000e+00> : vector<32x96xf32>
    %34 = tpu.matmul %32, %33, %cst {dimension_numbers = #tpu.dot_dimension_numbers<[1], [0], [0], [1], [0, 0, 1, 1], [], []>} : vector<32x32xf32>, vector<32x96xf32>, vector<32x96xf32> -> vector<32x96xf32>
    %35 = vector.extract_strided_slice %34 {offsets = [0, 0], sizes = [32, 32], strides = [1, 1]} : vector<32x96xf32> to vector<32x32xf32>
    %36 = vector.shape_cast %35 : vector<32x32xf32> to vector<2x16x32xf32>
    %37 = vector.extract_strided_slice %34 {offsets = [0, 32], sizes = [32, 32], strides = [1, 1]} : vector<32x96xf32> to vector<32x32xf32>
    %38 = vector.shape_cast %37 : vector<32x32xf32> to vector<2x16x32xf32>
    %39 = vector.extract_strided_slice %34 {offsets = [0, 64], sizes = [32, 32], strides = [1, 1]} : vector<32x96xf32> to vector<32x32xf32>
    %40 = vector.shape_cast %39 : vector<32x32xf32> to vector<2x16x32xf32>
    %41 = vector.extract_strided_slice %29 {offsets = [0, 0], sizes = [32, 32], strides = [1, 1]} : vector<32x128xf32> to vector<32x32xf32>
    %42 = vector.shape_cast %41 : vector<32x32xf32> to vector<1x32x32xf32>
    %43 = vector.shape_cast %42 : vector<1x32x32xf32> to vector<1x32x32xf32>
    %44 = vector.broadcast %43 : vector<1x32x32xf32> to vector<2x32x32xf32>
    "tpu.trace_start"() <{level = 10 : i32, message = "bqd,bkd->bqk"}> : () -> ()
    %cst_11 = arith.constant dense<0.000000e+00> : vector<2x32x16xf32>
    %45 = tpu.matmul %44, %36, %cst_11 {dimension_numbers = #tpu.dot_dimension_numbers<[2], [2], [1], [1], [0, 0, 0, 1, 1, 1], [0], [0]>} : vector<2x32x32xf32>, vector<2x16x32xf32>, vector<2x32x16xf32> -> vector<2x32x16xf32>
    "tpu.trace_stop"() : () -> ()
    %cst_12 = arith.constant dense<0xFF800000> : vector<2x32xf32>
    %46 = vector.multi_reduction <maximumf>, %45, %cst_12 [2] : vector<2x32x16xf32> to vector<2x32xf32>
    %47 = vector.shape_cast %46 : vector<2x32xf32> to vector<2x32x1xf32>
    %48 = vector.broadcast %47 : vector<2x32x1xf32> to vector<2x32x16xf32>
    %49 = arith.subf %45, %48 : vector<2x32x16xf32>
    %50 = math.exp %49 : vector<2x32x16xf32>
    %cst_13 = arith.constant dense<0.000000e+00> : vector<2x32xf32>
    %51 = vector.multi_reduction <add>, %50, %cst_13 [2] : vector<2x32x16xf32> to vector<2x32xf32>
    %52 = vector.shape_cast %51 : vector<2x32xf32> to vector<2x32x1xf32>
    %53 = tpu.reciprocal %52 : vector<2x32x1xf32> -> vector<2x32x1xf32>
    %54 = vector.broadcast %53 : vector<2x32x1xf32> to vector<2x32x16xf32>
    %55 = arith.mulf %50, %54 : vector<2x32x16xf32>
    "tpu.trace_start"() <{level = 10 : i32, message = "bqk,bkd->bqd"}> : () -> ()
    %cst_14 = arith.constant dense<0.000000e+00> : vector<2x32x32xf32>
    %56 = tpu.matmul %55, %38, %cst_14 {dimension_numbers = #tpu.dot_dimension_numbers<[2], [1], [1], [2], [0, 0, 0, 1, 1, 2], [0], [0]>} : vector<2x32x16xf32>, vector<2x16x32xf32>, vector<2x32x32xf32> -> vector<2x32x32xf32>
    "tpu.trace_stop"() : () -> ()
    %57 = vector.extract_strided_slice %56 {offsets = [0, 0, 0], sizes = [2, 8, 32], strides = [1, 1, 1]} : vector<2x32x32xf32> to vector<2x8x32xf32>
    %58 = vector.broadcast %7 : vector<1x1x32xf32> to vector<2x8x32xf32>
    %59 = arith.mulf %57, %58 : vector<2x8x32xf32>
    %60 = vector.extract_strided_slice %56 {offsets = [0, 8, 0], sizes = [2, 8, 32], strides = [1, 1, 1]} : vector<2x32x32xf32> to vector<2x8x32xf32>
    %61 = vector.broadcast %14 : vector<1x1x32xf32> to vector<2x8x32xf32>
    %62 = arith.mulf %60, %61 : vector<2x8x32xf32>
    %63 = arith.addf %59, %62 : vector<2x8x32xf32>
    %64 = vector.extract_strided_slice %56 {offsets = [0, 16, 0], sizes = [2, 8, 32], strides = [1, 1, 1]} : vector<2x32x32xf32> to vector<2x8x32xf32>
    %65 = vector.broadcast %21 : vector<1x1x32xf32> to vector<2x8x32xf32>
    %66 = arith.mulf %64, %65 : vector<2x8x32xf32>
    %67 = arith.addf %63, %66 : vector<2x8x32xf32>
    %68 = vector.extract_strided_slice %56 {offsets = [0, 24, 0], sizes = [2, 8, 32], strides = [1, 1, 1]} : vector<2x32x32xf32> to vector<2x8x32xf32>
    %69 = vector.broadcast %28 : vector<1x1x32xf32> to vector<2x8x32xf32>
    %70 = arith.mulf %68, %69 : vector<2x8x32xf32>
    %71 = arith.addf %67, %70 : vector<2x8x32xf32>
    %72 = vector.shape_cast %71 : vector<2x8x32xf32> to vector<16x32xf32>
    %73 = vector.extract_strided_slice %29 {offsets = [0, 32], sizes = [32, 64], strides = [1, 1]} : vector<32x128xf32> to vector<32x64xf32>
    %cst_15 = arith.constant dense<0.000000e+00> : vector<16x64xf32>
    %74 = tpu.matmul %72, %73, %cst_15 {dimension_numbers = #tpu.dot_dimension_numbers<[1], [0], [0], [1], [0, 0, 1, 1], [], []>} : vector<16x32xf32>, vector<32x64xf32>, vector<16x64xf32> -> vector<16x64xf32>
    %75 = vector.extract_strided_slice %30 {offsets = [0, 0], sizes = [1, 64], strides = [1, 1]} : vector<1x96xf32> to vector<1x64xf32>
    %76 = vector.broadcast %75 : vector<1x64xf32> to vector<16x64xf32>
    %77 = arith.addf %74, %76 : vector<16x64xf32>
    %78 = vector.extract_strided_slice %77 {offsets = [0, 0], sizes = [16, 32], strides = [1, 1]} : vector<16x64xf32> to vector<16x32xf32>
    %79 = vector.shape_cast %78 : vector<16x32xf32> to vector<2x8x32xf32>
    %80 = vector.extract_strided_slice %77 {offsets = [0, 32], sizes = [16, 32], strides = [1, 1]} : vector<16x64xf32> to vector<16x32xf32>
    %81 = vector.shape_cast %80 : vector<16x32xf32> to vector<2x8x32xf32>
    %82 = vector.broadcast %7 : vector<1x1x32xf32> to vector<2x16x32xf32>
    %83 = arith.mulf %40, %82 : vector<2x16x32xf32>
    %84 = vector.broadcast %14 : vector<1x1x32xf32> to vector<2x16x32xf32>
    %85 = arith.mulf %40, %84 : vector<2x16x32xf32>
    %86 = vector.broadcast %21 : vector<1x1x32xf32> to vector<2x16x32xf32>
    %87 = arith.mulf %40, %86 : vector<2x16x32xf32>
    %88 = vector.broadcast %28 : vector<1x1x32xf32> to vector<2x16x32xf32>
    %89 = arith.mulf %40, %88 : vector<2x16x32xf32>
    %90 = tpu.concatenate %83, %85, %87, %89 in 1 : vector<2x16x32xf32>, vector<2x16x32xf32>, vector<2x16x32xf32>, vector<2x16x32xf32> -> vector<2x64x32xf32>
    "tpu.trace_start"() <{level = 10 : i32, message = "bqd,bkd->bqk"}> : () -> ()
    %cst_16 = arith.constant dense<0.000000e+00> : vector<2x64x8xf32>
    %91 = tpu.matmul %90, %79, %cst_16 {dimension_numbers = #tpu.dot_dimension_numbers<[2], [2], [1], [1], [0, 0, 0, 1, 1, 1], [0], [0]>} : vector<2x64x32xf32>, vector<2x8x32xf32>, vector<2x64x8xf32> -> vector<2x64x8xf32>
    "tpu.trace_stop"() : () -> ()
    %cst_17 = arith.constant dense<0xFF800000> : vector<2x64xf32>
    %92 = vector.multi_reduction <maximumf>, %91, %cst_17 [2] : vector<2x64x8xf32> to vector<2x64xf32>
    %93 = vector.shape_cast %92 : vector<2x64xf32> to vector<2x64x1xf32>
    %94 = vector.broadcast %93 : vector<2x64x1xf32> to vector<2x64x8xf32>
    %95 = arith.subf %91, %94 : vector<2x64x8xf32>
    %96 = math.exp %95 : vector<2x64x8xf32>
    %cst_18 = arith.constant dense<0.000000e+00> : vector<2x64xf32>
    %97 = vector.multi_reduction <add>, %96, %cst_18 [2] : vector<2x64x8xf32> to vector<2x64xf32>
    %98 = vector.shape_cast %97 : vector<2x64xf32> to vector<2x64x1xf32>
    %99 = tpu.reciprocal %98 : vector<2x64x1xf32> -> vector<2x64x1xf32>
    %100 = vector.broadcast %99 : vector<2x64x1xf32> to vector<2x64x8xf32>
    %101 = arith.mulf %96, %100 : vector<2x64x8xf32>
    "tpu.trace_start"() <{level = 10 : i32, message = "bqk,bkd->bqd"}> : () -> ()
    %cst_19 = arith.constant dense<0.000000e+00> : vector<2x64x32xf32>
    %102 = tpu.matmul %101, %81, %cst_19 {dimension_numbers = #tpu.dot_dimension_numbers<[2], [1], [1], [2], [0, 0, 0, 1, 1, 2], [0], [0]>} : vector<2x64x8xf32>, vector<2x8x32xf32>, vector<2x64x32xf32> -> vector<2x64x32xf32>
    "tpu.trace_stop"() : () -> ()
    %103 = vector.extract_strided_slice %102 {offsets = [0, 0, 0], sizes = [2, 16, 32], strides = [1, 1, 1]} : vector<2x64x32xf32> to vector<2x16x32xf32>
    %104 = vector.broadcast %7 : vector<1x1x32xf32> to vector<2x16x32xf32>
    %105 = arith.mulf %103, %104 : vector<2x16x32xf32>
    %106 = vector.extract_strided_slice %102 {offsets = [0, 16, 0], sizes = [2, 16, 32], strides = [1, 1, 1]} : vector<2x64x32xf32> to vector<2x16x32xf32>
    %107 = vector.broadcast %14 : vector<1x1x32xf32> to vector<2x16x32xf32>
    %108 = arith.mulf %106, %107 : vector<2x16x32xf32>
    %109 = arith.addf %105, %108 : vector<2x16x32xf32>
    %110 = vector.extract_strided_slice %102 {offsets = [0, 32, 0], sizes = [2, 16, 32], strides = [1, 1, 1]} : vector<2x64x32xf32> to vector<2x16x32xf32>
    %111 = vector.broadcast %21 : vector<1x1x32xf32> to vector<2x16x32xf32>
    %112 = arith.mulf %110, %111 : vector<2x16x32xf32>
    %113 = arith.addf %109, %112 : vector<2x16x32xf32>
    %114 = vector.extract_strided_slice %102 {offsets = [0, 48, 0], sizes = [2, 16, 32], strides = [1, 1, 1]} : vector<2x64x32xf32> to vector<2x16x32xf32>
    %115 = vector.broadcast %28 : vector<1x1x32xf32> to vector<2x16x32xf32>
    %116 = arith.mulf %114, %115 : vector<2x16x32xf32>
    %117 = arith.addf %113, %116 : vector<2x16x32xf32>
    %118 = vector.shape_cast %117 : vector<2x16x32xf32> to vector<32x32xf32>
    %119 = vector.extract_strided_slice %29 {offsets = [0, 96], sizes = [32, 32], strides = [1, 1]} : vector<32x128xf32> to vector<32x32xf32>
    %cst_20 = arith.constant dense<0.000000e+00> : vector<32x32xf32>
    %120 = tpu.matmul %118, %119, %cst_20 {dimension_numbers = #tpu.dot_dimension_numbers<[1], [0], [0], [1], [0, 0, 1, 1], [], []>} : vector<32x32xf32>, vector<32x32xf32>, vector<32x32xf32> -> vector<32x32xf32>
    %121 = vector.extract_strided_slice %30 {offsets = [0, 64], sizes = [1, 32], strides = [1, 1]} : vector<1x96xf32> to vector<1x32xf32>
    %122 = vector.broadcast %121 : vector<1x32xf32> to vector<32x32xf32>
    %123 = arith.addf %120, %122 : vector<32x32xf32>
    %124 = vector.shape_cast %123 : vector<32x32xf32> to vector<2x16x32xf32>
    %c0_21 = arith.constant 0 : index
    %c0_22 = arith.constant 0 : index
    %c0_23 = arith.constant 0 : index
    %125 = vector.load %arg5[%c0_21, %c0_22, %c0_23] : memref<2x16x32xf32, #tpu.memory_space<vmem>>, vector<2x16x32xf32>
    tpu.vector_store %arg5[%c0_21, %c0_22, %c0_23], %124 {strides = array<i32>} : memref<2x16x32xf32, #tpu.memory_space<vmem>>, vector<2x16x32xf32>,
    return
  }
  func.func @transform_0(%arg0: i32) -> (i32, i32, i32) {
    %c0_i32 = arith.constant 0 : i32
    %c0_i32_0 = arith.constant 0 : i32
    %c0_i32_1 = arith.constant 0 : i32
    %c0_i32_2 = arith.constant 0 : i32
    return %c0_i32, %c0_i32_0, %c0_i32_1 : i32, i32, i32
  }
  func.func @transform_1(%arg0: i32) -> (i32, i32) {
    %c0_i32 = arith.constant 0 : i32
    %c0_i32_0 = arith.constant 0 : i32
    %c0_i32_1 = arith.constant 0 : i32
    return %c0_i32, %c0_i32_0 : i32, i32
  }
  func.func @transform_2(%arg0: i32) -> (i32, i32) {
    %c0_i32 = arith.constant 0 : i32
    %c0_i32_0 = arith.constant 0 : i32
    %c0_i32_1 = arith.constant 0 : i32
    return %c0_i32, %c0_i32_0 : i32, i32
  }
  func.func @transform_3(%arg0: i32) -> (i32, i32) {
    %c0_i32 = arith.constant 0 : i32
    %c0_i32_0 = arith.constant 0 : i32
    %c0_i32_1 = arith.constant 0 : i32
    return %c0_i32, %c0_i32_0 : i32, i32
  }
  func.func @transform_4(%arg0: i32) -> (i32, i32, i32) {
    %c0_i32 = arith.constant 0 : i32
    %c0_i32_0 = arith.constant 0 : i32
    %c0_i32_1 = arith.constant 0 : i32
    %c0_i32_2 = arith.constant 0 : i32
    return %c0_i32, %c0_i32_0, %c0_i32_1 : i32, i32, i32
  }
}

</mosaic_0001>

<llo_original>
// kernel: isab_forward.1
$region0: #{isab_forward.1}
  #allocation0 [shape = 'u32[]', space=smem, size = 0x4, offset = 0x4, fixed_abs, tag = 'smem constant byte address 0x4 - core index']
  #allocation1 [shape = 'u32[72,128]{1,0:T(1,128)}', space=vmem, size = 0x9000, scoped, tag = 'internal scratch']
  %s0 = inlined_call_operand.vmem [shape: f32[2,16,32], index: 0, kind: input, shape index: {}]
  %s1 = inlined_call_operand.vmem [shape: f32[32,96], index: 1, kind: input, shape index: {}]
  %s2 = inlined_call_operand.vmem [shape: f32[32,128], index: 2, kind: input, shape index: {}]
  %s3 = inlined_call_operand.vmem [shape: f32[1,96], index: 3, kind: input, shape index: {}]
  %s4 = inlined_call_operand.hbm [shape: f32[2,16,32], index: 4, kind: output, shape index: {}]
  %s5 = sld [smem:[#allocation0]]
  $region26: #{isab_forward.1} parent=0
    _
  %s7 = ssub.s32 1, %s5
  %s8 = scalar_select 0, %s7, %s5
  $region1: #{isab_forward.1} parent=0
    #allocation2 [shape = 'u8[16384]{0}', space=vmem, size = 0x4000, scoped, tag = 'output window, operand 0, single buffered']
    #allocation3 [shape = 's32[1]{0}', space=sflag, size = 0x4, scoped, tag = 'scoped memory for isab_forward.1']
    %9 = vsyncpa [#allocation3], 0
    // Predicated region
    $region2: #{isab_forward.1} parent=1 // pred_check
      _
    $region3: #{isab_forward.1} parent=1 // pred_check_branch
      %11 = sbr.rel (0) target = $region5
    $region4: #{isab_forward.1} parent=1 // pred_region
      _
    $region5: #{isab_forward.1} parent=1 // pred_fallthru
      _
    // Predicated region
    $region6: #{isab_forward.1} parent=1 // pred_check
      _
    $region7: #{isab_forward.1} parent=1 // pred_check_branch
      %13 = sbr.rel (0) target = $region9
    $region8: #{isab_forward.1} parent=1 // pred_region
      _
    $region9: #{isab_forward.1} parent=1 // pred_fallthru
      _
    // Predicated region
    $region10: #{isab_forward.1} parent=1 // pred_check
      _
    $region11: #{isab_forward.1} parent=1 // pred_check_branch
      %15 = sbr.rel (0) target = $region13
    $region12: #{isab_forward.1} parent=1 // pred_region
      _
    $region13: #{isab_forward.1} parent=1 // pred_fallthru
      _
    // Predicated region
    $region14: #{isab_forward.1} parent=1 // pred_check
      _
    $region15: #{isab_forward.1} parent=1 // pred_check_branch
      %17 = sbr.rel (0) target = $region17
    $region16: #{isab_forward.1} parent=1 // pred_region
      _
    $region17: #{isab_forward.1} parent=1 // pred_fallthru
      _
    %v18 = vlaneseq
    %v19 = vand.u32 %v18, 127
    %vm20 = vcmp.ge.s32.totalorder %v19, 0
    %vm21 = vcmp.lt.s32.totalorder %v19, 8
    %vm22 = vmand %vm20, %vm21
    %v23 = vsel %vm22, 1, 0
    %v24 = vcvt.s32.f32 %v23
    %vm25 = vcmp.ge.s32.totalorder %v19, 8
    %vm26 = vcmp.lt.s32.totalorder %v19, 16
    %vm27 = vmand %vm25, %vm26
    %v28 = vsel %vm27, 1, 0
    %v29 = vcvt.s32.f32 %v28
    %vm30 = vcmp.ge.s32.totalorder %v19, 16
    %vm31 = vcmp.lt.s32.totalorder %v19, 24
    %vm32 = vmand %vm30, %vm31
    %v33 = vsel %vm32, 1, 0
    %v34 = vcvt.s32.f32 %v33
    %vm35 = vcmp.ge.s32.totalorder %v19, 24
    %vm36 = vcmp.lt.s32.totalorder %v19, 32
    %vm37 = vmand %vm35, %vm36
    %v38 = vsel %vm37, 1, 0
    %v39 = vcvt.s32.f32 %v38
    %v40 = vld [vmem:[%s2] sm:$0xff]
    %v41 = vld [vmem:[%s2 + $0x8] sm:$0xff]
    %v42 = vld [vmem:[%s2 + $0x10] sm:$0xff]
    %v43 = vld [vmem:[%s2 + $0x18] sm:$0xff]
    %v44 = vld [vmem:[%s3] sm:$0x1]
    %v45 = vld [vmem:[%s0] sm:$0xff]
    %v46 = vld [vmem:[%s0 + $0x8] sm:$0xff]
    %v47 = vld [vmem:[%s0 + $0x10] sm:$0xff]
    %v48 = vld [vmem:[%s0 + $0x18] sm:$0xff]
    %v49 = vld [vmem:[%s1] sm:$0xff]
    %v50 = vld [vmem:[%s1 + $0x8] sm:$0xff]
    %v51 = vld [vmem:[%s1 + $0x10] sm:$0xff]
    %v52 = vld [vmem:[%s1 + $0x18] sm:$0xff]
    %vm53 = vcmask 261120
    %v55 = vsel %vm53, %v45, 0
    %v58 = vsel %vm53, %v46, 0
    %v61 = vsel %vm53, %v47, 0
    %v64 = vsel %vm53, %v48, 0
    %66 = vmatpush.msra.mxu0 0.0
    %67 = vmatpush.msra.mxu0 0.0
    %68 = vmatpush.msra.mxu0 0.0
    %69 = vmatpush.msra.mxu0 0.0
    %70 = vmatpush.msra.mxu0 0.0
    %71 = vmatpush.msra.mxu0 0.0
    %72 = vmatpush.msra.mxu0 0.0
    %73 = vmatpush.msra.mxu0 0.0
    %74 = vmatpush.msra.mxu0 0.0
    %75 = vmatpush.msra.mxu0 0.0
    %76 = vmatpush.msra.mxu0 0.0
    %77 = vmatpush.msra.mxu0 0.0
    %78 = vmatpush.msra.mxu0 %v52
    %79 = vmatpush.msra.mxu0 %v51
    %80 = vmatpush.msra.mxu0 %v50
    %81 = vmatpush.msra.mxu0 %v49
    %82 = vmatmul.f32.gmra.mxu0 %v55
    %v83 = vpop.f32.mrf.mxu0
    %v84 = vadd.f32 0.0, %v83
    %85 = vmatmul.f32.gmra.mxu0 %v58
    %v86 = vpop.f32.mrf.mxu0
    %v87 = vadd.f32 0.0, %v86
    %88 = vmatmul.f32.gmra.mxu0 %v61
    %v89 = vpop.f32.mrf.mxu0
    %v90 = vadd.f32 0.0, %v89
    %91 = vmatmul.f32.gmra.mxu0 %v64
    %v92 = vpop.f32.mrf.mxu0
    %v93 = vadd.f32 0.0, %v92
    %94 = vdwg.mxu0
    %v96 = vsel %vm53, %v40, 0
    %v99 = vsel %vm53, %v41, 0
    %v102 = vsel %vm53, %v42, 0
    %v105 = vsel %vm53, %v43, 0
    %v108 = vsel %vm53, %v84, 0
    %v111 = vsel %vm53, %v87, 0
    %113 = vmatpush.xpose.msra.mxu0 0.0
    %114 = vmatpush.xpose.msra.mxu0 0.0
    %115 = vmatpush.xpose.msra.mxu0 0.0
    %116 = vmatpush.xpose.msra.mxu0 0.0
    %117 = vmatpush.xpose.msra.mxu0 0.0
    %118 = vmatpush.xpose.msra.mxu0 0.0
    %119 = vmatpush.xpose.msra.mxu0 0.0
    %120 = vmatpush.xpose.msra.mxu0 0.0
    %121 = vmatpush.xpose.msra.mxu0 0.0
    %122 = vmatpush.xpose.msra.mxu0 0.0
    %123 = vmatpush.xpose.msra.mxu0 0.0
    %124 = vmatpush.xpose.msra.mxu0 0.0
    %125 = vmatpush.xpose.msra.mxu0 0.0
    %126 = vmatpush.xpose.msra.mxu0 0.0
    %127 = vmatpush.xpose.msra.mxu0 %v111
    %128 = vmatpush.xpose.msra.mxu0 %v108
    %129 = vmatmul.f32.gmra.mxu0 %v96
    %v130 = vpop.f32.mrf.mxu0
    %v131 = vadd.f32 0.0, %v130
    %132 = vmatmul.f32.gmra.mxu0 %v99
    %v133 = vpop.f32.mrf.mxu0
    %v134 = vadd.f32 0.0, %v133
    %135 = vmatmul.f32.gmra.mxu0 %v102
    %v136 = vpop.f32.mrf.mxu0
    %v137 = vadd.f32 0.0, %v136
    %138 = vmatmul.f32.gmra.mxu0 %v105
    %v139 = vpop.f32.mrf.mxu0
    %v140 = vadd.f32 0.0, %v139
    %141 = vdwg.mxu0
    %v143 = vsel %vm53, %v90, 0
    %v146 = vsel %vm53, %v93, 0
    %148 = vmatpush.xpose.msra.mxu0 0.0
    %149 = vmatpush.xpose.msra.mxu0 0.0
    %150 = vmatpush.xpose.msra.mxu0 0.0
    %151 = vmatpush.xpose.msra.mxu0 0.0
    %152 = vmatpush.xpose.msra.mxu0 0.0
    %153 = vmatpush.xpose.msra.mxu0 0.0
    %154 = vmatpush.xpose.msra.mxu0 0.0
    %155 = vmatpush.xpose.msra.mxu0 0.0
    %156 = vmatpush.xpose.msra.mxu0 0.0
    %157 = vmatpush.xpose.msra.mxu0 0.0
    %158 = vmatpush.xpose.msra.mxu0 0.0
    %159 = vmatpush.xpose.msra.mxu0 0.0
    %160 = vmatpush.xpose.msra.mxu0 0.0
    %161 = vmatpush.xpose.msra.mxu0 0.0
    %162 = vmatpush.xpose.msra.mxu0 %v146
    %163 = vmatpush.xpose.msra.mxu0 %v143
    %164 = vmatmul.f32.gmra.mxu0 %v96
    %v165 = vpop.f32.mrf.mxu0
    %v166 = vadd.f32 0.0, %v165
    %167 = vmatmul.f32.gmra.mxu0 %v99
    %v168 = vpop.f32.mrf.mxu0
    %v169 = vadd.f32 0.0, %v168
    %170 = vmatmul.f32.gmra.mxu0 %v102
    %v171 = vpop.f32.mrf.mxu0
    %v172 = vadd.f32 0.0, %v171
    %173 = vmatmul.f32.gmra.mxu0 %v105
    %v174 = vpop.f32.mrf.mxu0
    %v175 = vadd.f32 0.0, %v174
    %176 = vdwg.mxu0
    %vm177 = vcmask 130048
    %v178 = vsel %vm177, %v131, -inf
    %179 = vmax.xlane.f32.xlu0 %v178
    %v180 = vpop.xlane.xlu0 %179
    %v181 = vsel %vm177, %v134, -inf
    %182 = vmax.xlane.f32.xlu0 %v181
    %v183 = vpop.xlane.xlu0 %182
    %v184 = vsel %vm177, %v137, -inf
    %185 = vmax.xlane.f32.xlu0 %v184
    %v186 = vpop.xlane.xlu0 %185
    %v187 = vsel %vm177, %v140, -inf
    %188 = vmax.xlane.f32.xlu0 %v187
    %v189 = vpop.xlane.xlu0 %188
    %v190 = vsel %vm177, %v166, -inf
    %191 = vmax.xlane.f32.xlu0 %v190
    %v192 = vpop.xlane.xlu0 %191
    %v193 = vsel %vm177, %v169, -inf
    %194 = vmax.xlane.f32.xlu0 %v193
    %v195 = vpop.xlane.xlu0 %194
    %v196 = vsel %vm177, %v172, -inf
    %197 = vmax.xlane.f32.xlu0 %v196
    %v198 = vpop.xlane.xlu0 %197
    %v199 = vsel %vm177, %v175, -inf
    %200 = vmax.xlane.f32.xlu0 %v199
    %v201 = vpop.xlane.xlu0 %200
    %v202 = vsub.f32 %v131, %v180
    %v203 = vsub.f32 %v134, %v183
    %v204 = vsub.f32 %v137, %v186
    %v205 = vsub.f32 %v140, %v189
    %v206 = vsub.f32 %v166, %v192
    %v207 = vsub.f32 %v169, %v195
    %v208 = vsub.f32 %v172, %v198
    %v209 = vsub.f32 %v175, %v201
    %v210 = vmul.f32 %v202, 1.442695
    %v211 = vpow.pop %v210
    %v212 = vmul.f32 %v203, 1.442695
    %v213 = vpow.pop %v212
    %v214 = vmul.f32 %v204, 1.442695
    %v215 = vpow.pop %v214
    %v216 = vmul.f32 %v205, 1.442695
    %v217 = vpow.pop %v216
    %v218 = vmul.f32 %v206, 1.442695
    %v219 = vpow.pop %v218
    %v220 = vmul.f32 %v207, 1.442695
    %v221 = vpow.pop %v220
    %v222 = vmul.f32 %v208, 1.442695
    %v223 = vpow.pop %v222
    %v224 = vmul.f32 %v209, 1.442695
    %v225 = vpow.pop %v224
    %v226 = vsel %vm177, %v211, 0.0
    %227 = vadd.xlane.f32.xlu0 %v226
    %v228 = vpop.xlane.xlu0 %227
    %v229 = vsel %vm177, %v213, 0.0
    %230 = vadd.xlane.f32.xlu0 %v229
    %v231 = vpop.xlane.xlu0 %230
    %v232 = vsel %vm177, %v215, 0.0
    %233 = vadd.xlane.f32.xlu0 %v232
    %v234 = vpop.xlane.xlu0 %233
    %v235 = vsel %vm177, %v217, 0.0
    %236 = vadd.xlane.f32.xlu0 %v235
    %v237 = vpop.xlane.xlu0 %236
    %v238 = vsel %vm177, %v219, 0.0
    %239 = vadd.xlane.f32.xlu0 %v238
    %v240 = vpop.xlane.xlu0 %239
    %v241 = vsel %vm177, %v221, 0.0
    %242 = vadd.xlane.f32.xlu0 %v241
    %v243 = vpop.xlane.xlu0 %242
    %v244 = vsel %vm177, %v223, 0.0
    %245 = vadd.xlane.f32.xlu0 %v244
    %v246 = vpop.xlane.xlu0 %245
    %v247 = vsel %vm177, %v225, 0.0
    %248 = vadd.xlane.f32.xlu0 %v247
    %v249 = vpop.xlane.xlu0 %248
    %v250 = vrcp.pop %v228
    %v251 = vmul.f32 %v228, %v250
    %v252 = vsub.f32 1.0, %v251
    %v253 = vmul.f32 %v250, %v252
    %v254 = vadd.f32 %v250, %v253
    %vm255 = vweird.f32 %v228
    %vm256 = vweird.f32 %v250
    %vm257 = vmor %vm255, %vm256
    %v258 = vsel %vm257, %v250, %v254
    %v259 = vand.u32 2147483647, %v228
    %vm260 = vcmp.eq.f32.partialorder %v259, 8.507059e+37
    %v261 = vand.u32 %v228, 2147483648
    %v262 = vor.u32 1.1754944e-38, %v261
    %v263 = vsel %vm260, %v262, %v258
    %v264 = vrcp.pop %v231
    %v265 = vmul.f32 %v231, %v264
    %v266 = vsub.f32 1.0, %v265
    %v267 = vmul.f32 %v264, %v266
    %v268 = vadd.f32 %v264, %v267
    %vm269 = vweird.f32 %v231
    %vm270 = vweird.f32 %v264
    %vm271 = vmor %vm269, %vm270
    %v272 = vsel %vm271, %v264, %v268
    %v273 = vand.u32 2147483647, %v231
    %vm274 = vcmp.eq.f32.partialorder %v273, 8.507059e+37
    %v275 = vand.u32 %v231, 2147483648
    %v276 = vor.u32 1.1754944e-38, %v275
    %v277 = vsel %vm274, %v276, %v272
    %v278 = vrcp.pop %v234
    %v279 = vmul.f32 %v234, %v278
    %v280 = vsub.f32 1.0, %v279
    %v281 = vmul.f32 %v278, %v280
    %v282 = vadd.f32 %v278, %v281
    %vm283 = vweird.f32 %v234
    %vm284 = vweird.f32 %v278
    %vm285 = vmor %vm283, %vm284
    %v286 = vsel %vm285, %v278, %v282
    %v287 = vand.u32 2147483647, %v234
    %vm288 = vcmp.eq.f32.partialorder %v287, 8.507059e+37
    %v289 = vand.u32 %v234, 2147483648
    %v290 = vor.u32 1.1754944e-38, %v289
    %v291 = vsel %vm288, %v290, %v286
    %v292 = vrcp.pop %v237
    %v293 = vmul.f32 %v237, %v292
    %v294 = vsub.f32 1.0, %v293
    %v295 = vmul.f32 %v292, %v294
    %v296 = vadd.f32 %v292, %v295
    %vm297 = vweird.f32 %v237
    %vm298 = vweird.f32 %v292
    %vm299 = vmor %vm297, %vm298
    %v300 = vsel %vm299, %v292, %v296
    %v301 = vand.u32 2147483647, %v237
    %vm302 = vcmp.eq.f32.partialorder %v301, 8.507059e+37
    %v303 = vand.u32 %v237, 2147483648
    %v304 = vor.u32 1.1754944e-38, %v303
    %v305 = vsel %vm302, %v304, %v300
    %v306 = vrcp.pop %v240
    %v307 = vmul.f32 %v240, %v306
    %v308 = vsub.f32 1.0, %v307
    %v309 = vmul.f32 %v306, %v308
    %v310 = vadd.f32 %v306, %v309
    %vm311 = vweird.f32 %v240
    %vm312 = vweird.f32 %v306
    %vm313 = vmor %vm311, %vm312
    %v314 = vsel %vm313, %v306, %v310
    %v315 = vand.u32 2147483647, %v240
    %vm316 = vcmp.eq.f32.partialorder %v315, 8.507059e+37
    %v317 = vand.u32 %v240, 2147483648
    %v318 = vor.u32 1.1754944e-38, %v317
    %v319 = vsel %vm316, %v318, %v314
    %v320 = vrcp.pop %v243
    %v321 = vmul.f32 %v243, %v320
    %v322 = vsub.f32 1.0, %v321
    %v323 = vmul.f32 %v320, %v322
    %v324 = vadd.f32 %v320, %v323
    %vm325 = vweird.f32 %v243
    %vm326 = vweird.f32 %v320
    %vm327 = vmor %vm325, %vm326
    %v328 = vsel %vm327, %v320, %v324
    %v329 = vand.u32 2147483647, %v243
    %vm330 = vcmp.eq.f32.partialorder %v329, 8.507059e+37
    %v331 = vand.u32 %v243, 2147483648
    %v332 = vor.u32 1.1754944e-38, %v331
    %v333 = vsel %vm330, %v332, %v328
    %v334 = vrcp.pop %v246
    %v335 = vmul.f32 %v246, %v334
    %v336 = vsub.f32 1.0, %v335
    %v337 = vmul.f32 %v334, %v336
    %v338 = vadd.f32 %v334, %v337
    %vm339 = vweird.f32 %v246
    %vm340 = vweird.f32 %v334
    %vm341 = vmor %vm339, %vm340
    %v342 = vsel %vm341, %v334, %v338
    %v343 = vand.u32 2147483647, %v246
    %vm344 = vcmp.eq.f32.partialorder %v343, 8.507059e+37
    %v345 = vand.u32 %v246, 2147483648
    %v346 = vor.u32 1.1754944e-38, %v345
    %v347 = vsel %vm344, %v346, %v342
    %v348 = vrcp.pop %v249
    %v349 = vmul.f32 %v249, %v348
    %v350 = vsub.f32 1.0, %v349
    %v351 = vmul.f32 %v348, %v350
    %v352 = vadd.f32 %v348, %v351
    %vm353 = vweird.f32 %v249
    %vm354 = vweird.f32 %v348
    %vm355 = vmor %vm353, %vm354
    %v356 = vsel %vm355, %v348, %v352
    %v357 = vand.u32 2147483647, %v249
    %vm358 = vcmp.eq.f32.partialorder %v357, 8.507059e+37
    %v359 = vand.u32 %v249, 2147483648
    %v360 = vor.u32 1.1754944e-38, %v359
    %v361 = vsel %vm358, %v360, %v356
    %v362 = vmul.f32 %v211, %v263
    %v363 = vmul.f32 %v213, %v277
    %v364 = vmul.f32 %v215, %v291
    %v365 = vmul.f32 %v217, %v305
    %v366 = vmul.f32 %v219, %v319
    %v367 = vmul.f32 %v221, %v333
    %v368 = vmul.f32 %v223, %v347
    %v369 = vmul.f32 %v225, %v361
    %370 = vrot.lane.b32.xlu0 %v84, 96
    %v371 = vpop.permute.xlu0 %370
    %372 = vrot.lane.b32.xlu0 %v87, 96
    %v373 = vpop.permute.xlu0 %372
    %v377 = vsel %vm177, %v362, 0
    %v380 = vsel %vm177, %v363, 0
    %v383 = vsel %vm177, %v364, 0
    %v386 = vsel %vm177, %v365, 0
    %388 = vmatpush.msra.mxu0 0.0
    %389 = vmatpush.msra.mxu0 0.0
    %390 = vmatpush.msra.mxu0 0.0
    %391 = vmatpush.msra.mxu0 0.0
    %392 = vmatpush.msra.mxu0 0.0
    %393 = vmatpush.msra.mxu0 0.0
    %394 = vmatpush.msra.mxu0 0.0
    %395 = vmatpush.msra.mxu0 0.0
    %396 = vmatpush.msra.mxu0 0.0
    %397 = vmatpush.msra.mxu0 0.0
    %398 = vmatpush.msra.mxu0 0.0
    %399 = vmatpush.msra.mxu0 0.0
    %400 = vmatpush.msra.mxu0 0.0
    %401 = vmatpush.msra.mxu0 0.0
    %402 = vmatpush.msra.mxu0 %v373
    %403 = vmatpush.msra.mxu0 %v371
    %404 = vmatmul.f32.gmra.mxu0 %v377
    %v405 = vpop.f32.mrf.mxu0
    %v406 = vadd.f32 0.0, %v405
    %407 = vmatmul.f32.gmra.mxu0 %v380
    %v408 = vpop.f32.mrf.mxu0
    %v409 = vadd.f32 0.0, %v408
    %410 = vmatmul.f32.gmra.mxu0 %v383
    %v411 = vpop.f32.mrf.mxu0
    %v412 = vadd.f32 0.0, %v411
    %413 = vmatmul.f32.gmra.mxu0 %v386
    %v414 = vpop.f32.mrf.mxu0
    %v415 = vadd.f32 0.0, %v414
    %416 = vdwg.mxu0
    %417 = vrot.lane.b32.xlu0 %v90, 96
    %v418 = vpop.permute.xlu0 %417
    %419 = vrot.lane.b32.xlu0 %v93, 96
    %v420 = vpop.permute.xlu0 %419
    %v424 = vsel %vm177, %v366, 0
    %v427 = vsel %vm177, %v367, 0
    %v430 = vsel %vm177, %v368, 0
    %v433 = vsel %vm177, %v369, 0
    %435 = vmatpush.msra.mxu0 0.0
    %436 = vmatpush.msra.mxu0 0.0
    %437 = vmatpush.msra.mxu0 0.0
    %438 = vmatpush.msra.mxu0 0.0
    %439 = vmatpush.msra.mxu0 0.0
    %440 = vmatpush.msra.mxu0 0.0
    %441 = vmatpush.msra.mxu0 0.0
    %442 = vmatpush.msra.mxu0 0.0
    %443 = vmatpush.msra.mxu0 0.0
    %444 = vmatpush.msra.mxu0 0.0
    %445 = vmatpush.msra.mxu0 0.0
    %446 = vmatpush.msra.mxu0 0.0
    %447 = vmatpush.msra.mxu0 0.0
    %448 = vmatpush.msra.mxu0 0.0
    %449 = vmatpush.msra.mxu0 %v420
    %450 = vmatpush.msra.mxu0 %v418
    %451 = vmatmul.f32.gmra.mxu0 %v424
    %v452 = vpop.f32.mrf.mxu0
    %v453 = vadd.f32 0.0, %v452
    %454 = vmatmul.f32.gmra.mxu0 %v427
    %v455 = vpop.f32.mrf.mxu0
    %v456 = vadd.f32 0.0, %v455
    %457 = vmatmul.f32.gmra.mxu0 %v430
    %v458 = vpop.f32.mrf.mxu0
    %v459 = vadd.f32 0.0, %v458
    %460 = vmatmul.f32.gmra.mxu0 %v433
    %v461 = vpop.f32.mrf.mxu0
    %v462 = vadd.f32 0.0, %v461
    %463 = vdwg.mxu0
    %v464 = vmul.f32 %v406, %v24
    %v465 = vmul.f32 %v453, %v24
    %v466 = vmul.f32 %v409, %v29
    %v467 = vmul.f32 %v456, %v29
    %v468 = vadd.f32 %v464, %v466
    %v469 = vadd.f32 %v465, %v467
    %v470 = vmul.f32 %v412, %v34
    %v471 = vmul.f32 %v459, %v34
    %v472 = vadd.f32 %v468, %v470
    %v473 = vadd.f32 %v469, %v471
    %v474 = vmul.f32 %v415, %v39
    %v475 = vmul.f32 %v462, %v39
    %v476 = vadd.f32 %v472, %v474
    %v477 = vadd.f32 %v473, %v475
    %v479 = vperm.slane %v44, 0
    %481 = vrot.lane.b32.xlu0 %v40, 96
    %v482 = vpop.permute.xlu0 %481
    %483 = vrot.lane.b32.xlu0 %v41, 96
    %v484 = vpop.permute.xlu0 %483
    %485 = vrot.lane.b32.xlu0 %v42, 96
    %v486 = vpop.permute.xlu0 %485
    %487 = vrot.lane.b32.xlu0 %v43, 96
    %v488 = vpop.permute.xlu0 %487
    %v494 = vsel %vm53, %v476, 0
    %v497 = vsel %vm53, %v477, 0
    %499 = vmatpush.msra.mxu0 0.0
    %500 = vmatpush.msra.mxu0 0.0
    %501 = vmatpush.msra.mxu0 0.0
    %502 = vmatpush.msra.mxu0 0.0
    %503 = vmatpush.msra.mxu0 0.0
    %504 = vmatpush.msra.mxu0 0.0
    %505 = vmatpush.msra.mxu0 0.0
    %506 = vmatpush.msra.mxu0 0.0
    %507 = vmatpush.msra.mxu0 0.0
    %508 = vmatpush.msra.mxu0 0.0
    %509 = vmatpush.msra.mxu0 0.0
    %510 = vmatpush.msra.mxu0 0.0
    %511 = vmatpush.msra.mxu0 %v488
    %512 = vmatpush.msra.mxu0 %v486
    %513 = vmatpush.msra.mxu0 %v484
    %514 = vmatpush.msra.mxu0 %v482
    %515 = vmatmul.f32.gmra.mxu0 %v494
    %v516 = vpop.f32.mrf.mxu0
    %v517 = vadd.f32 %v479, %v516
    %518 = vmatmul.f32.gmra.mxu0 %v497
    %v519 = vpop.f32.mrf.mxu0
    %v520 = vadd.f32 %v479, %v519
    %521 = vdwg.mxu0
    %523 = vrot.lane.b32.xlu0 %v24, 64
    %v524 = vpop.permute.xlu0 %523
    %v526 = vmul.f32 %v84, %v524
    %v527 = vmul.f32 %v87, %v524
    %v528 = vmul.f32 %v90, %v524
    %v529 = vmul.f32 %v93, %v524
    %531 = vrot.lane.b32.xlu0 %v29, 64
    %v532 = vpop.permute.xlu0 %531
    %v534 = vmul.f32 %v84, %v532
    %v535 = vmul.f32 %v87, %v532
    %v536 = vmul.f32 %v90, %v532
    %v537 = vmul.f32 %v93, %v532
    %539 = vrot.lane.b32.xlu0 %v34, 64
    %v540 = vpop.permute.xlu0 %539
    %v542 = vmul.f32 %v84, %v540
    %v543 = vmul.f32 %v87, %v540
    %v544 = vmul.f32 %v90, %v540
    %v545 = vmul.f32 %v93, %v540
    %547 = vrot.lane.b32.xlu0 %v39, 64
    %v548 = vpop.permute.xlu0 %547
    %v550 = vmul.f32 %v84, %v548
    %v551 = vmul.f32 %v87, %v548
    %v552 = vmul.f32 %v90, %v548
    %v553 = vmul.f32 %v93, %v548
    %562 = vrot.lane.b32.xlu0 %v526, 64
    %v563 = vpop.permute.xlu0 %562
    %564 = vrot.lane.b32.xlu0 %v527, 64
    %v565 = vpop.permute.xlu0 %564
    %566 = vrot.lane.b32.xlu0 %v534, 64
    %v567 = vpop.permute.xlu0 %566
    %568 = vrot.lane.b32.xlu0 %v535, 64
    %v569 = vpop.permute.xlu0 %568
    %570 = vrot.lane.b32.xlu0 %v542, 64
    %v571 = vpop.permute.xlu0 %570
    %572 = vrot.lane.b32.xlu0 %v543, 64
    %v573 = vpop.permute.xlu0 %572
    %574 = vrot.lane.b32.xlu0 %v550, 64
    %v575 = vpop.permute.xlu0 %574
    %576 = vrot.lane.b32.xlu0 %v551, 64
    %v577 = vpop.permute.xlu0 %576
    %v578 = vsel %vm53, %v563, 0
    %v580 = vsel %vm53, %v565, 0
    %v582 = vsel %vm53, %v567, 0
    %v584 = vsel %vm53, %v569, 0
    %v586 = vsel %vm53, %v571, 0
    %v588 = vsel %vm53, %v573, 0
    %v590 = vsel %vm53, %v575, 0
    %v592 = vsel %vm53, %v577, 0
    %v595 = vsel %vm53, %v517, 0
    %597 = vmatpush.xpose.msra.mxu0 0.0
    %598 = vmatpush.xpose.msra.mxu0 0.0
    %599 = vmatpush.xpose.msra.mxu0 0.0
    %600 = vmatpush.xpose.msra.mxu0 0.0
    %601 = vmatpush.xpose.msra.mxu0 0.0
    %602 = vmatpush.xpose.msra.mxu0 0.0
    %603 = vmatpush.xpose.msra.mxu0 0.0
    %604 = vmatpush.xpose.msra.mxu0 0.0
    %605 = vmatpush.xpose.msra.mxu0 0.0
    %606 = vmatpush.xpose.msra.mxu0 0.0
    %607 = vmatpush.xpose.msra.mxu0 0.0
    %608 = vmatpush.xpose.msra.mxu0 0.0
    %609 = vmatpush.xpose.msra.mxu0 0.0
    %610 = vmatpush.xpose.msra.mxu0 0.0
    %611 = vmatpush.xpose.msra.mxu0 0.0
    %612 = vmatpush.xpose.msra.mxu0 %v595
    %613 = vmatmul.f32.gmra.mxu0 %v578
    %v614 = vpop.f32.mrf.mxu0
    %v615 = vadd.f32 0.0, %v614
    %616 = vmatmul.f32.gmra.mxu0 %v580
    %v617 = vpop.f32.mrf.mxu0
    %v618 = vadd.f32 0.0, %v617
    %619 = vmatmul.f32.gmra.mxu0 %v582
    %v620 = vpop.f32.mrf.mxu0
    %v621 = vadd.f32 0.0, %v620
    %622 = vmatmul.f32.gmra.mxu0 %v584
    %v623 = vpop.f32.mrf.mxu0
    %v624 = vadd.f32 0.0, %v623
    %625 = vmatmul.f32.gmra.mxu0 %v586
    %v626 = vpop.f32.mrf.mxu0
    %v627 = vadd.f32 0.0, %v626
    %628 = vmatmul.f32.gmra.mxu0 %v588
    %v629 = vpop.f32.mrf.mxu0
    %v630 = vadd.f32 0.0, %v629
    %631 = vmatmul.f32.gmra.mxu0 %v590
    %v632 = vpop.f32.mrf.mxu0
    %v633 = vadd.f32 0.0, %v632
    %634 = vmatmul.f32.gmra.mxu0 %v592
    %v635 = vpop.f32.mrf.mxu0
    %v636 = vadd.f32 0.0, %v635
    %637 = vdwg.mxu0
    %646 = vrot.lane.b32.xlu0 %v528, 64
    %v647 = vpop.permute.xlu0 %646
    %648 = vrot.lane.b32.xlu0 %v529, 64
    %v649 = vpop.permute.xlu0 %648
    %650 = vrot.lane.b32.xlu0 %v536, 64
    %v651 = vpop.permute.xlu0 %650
    %652 = vrot.lane.b32.xlu0 %v537, 64
    %v653 = vpop.permute.xlu0 %652
    %654 = vrot.lane.b32.xlu0 %v544, 64
    %v655 = vpop.permute.xlu0 %654
    %656 = vrot.lane.b32.xlu0 %v545, 64
    %v657 = vpop.permute.xlu0 %656
    %658 = vrot.lane.b32.xlu0 %v552, 64
    %v659 = vpop.permute.xlu0 %658
    %660 = vrot.lane.b32.xlu0 %v553, 64
    %v661 = vpop.permute.xlu0 %660
    %v662 = vsel %vm53, %v647, 0
    %v664 = vsel %vm53, %v649, 0
    %v666 = vsel %vm53, %v651, 0
    %v668 = vsel %vm53, %v653, 0
    %v670 = vsel %vm53, %v655, 0
    %v672 = vsel %vm53, %v657, 0
    %v674 = vsel %vm53, %v659, 0
    %v676 = vsel %vm53, %v661, 0
    %v679 = vsel %vm53, %v520, 0
    %681 = vmatpush.xpose.msra.mxu0 0.0
    %682 = vmatpush.xpose.msra.mxu0 0.0
    %683 = vmatpush.xpose.msra.mxu0 0.0
    %684 = vmatpush.xpose.msra.mxu0 0.0
    %685 = vmatpush.xpose.msra.mxu0 0.0
    %686 = vmatpush.xpose.msra.mxu0 0.0
    %687 = vmatpush.xpose.msra.mxu0 0.0
    %688 = vmatpush.xpose.msra.mxu0 0.0
    %689 = vmatpush.xpose.msra.mxu0 0.0
    %690 = vmatpush.xpose.msra.mxu0 0.0
    %691 = vmatpush.xpose.msra.mxu0 0.0
    %692 = vmatpush.xpose.msra.mxu0 0.0
    %693 = vmatpush.xpose.msra.mxu0 0.0
    %694 = vmatpush.xpose.msra.mxu0 0.0
    %695 = vmatpush.xpose.msra.mxu0 0.0
    %696 = vmatpush.xpose.msra.mxu0 %v679
    %697 = vmatmul.f32.gmra.mxu0 %v662
    %v698 = vpop.f32.mrf.mxu0
    %v699 = vadd.f32 0.0, %v698
    %700 = vmatmul.f32.gmra.mxu0 %v664
    %v701 = vpop.f32.mrf.mxu0
    %v702 = vadd.f32 0.0, %v701
    %703 = vmatmul.f32.gmra.mxu0 %v666
    %v704 = vpop.f32.mrf.mxu0
    %v705 = vadd.f32 0.0, %v704
    %706 = vmatmul.f32.gmra.mxu0 %v668
    %v707 = vpop.f32.mrf.mxu0
    %v708 = vadd.f32 0.0, %v707
    %709 = vmatmul.f32.gmra.mxu0 %v670
    %v710 = vpop.f32.mrf.mxu0
    %v711 = vadd.f32 0.0, %v710
    %712 = vmatmul.f32.gmra.mxu0 %v672
    %v713 = vpop.f32.mrf.mxu0
    %v714 = vadd.f32 0.0, %v713
    %715 = vmatmul.f32.gmra.mxu0 %v674
    %v716 = vpop.f32.mrf.mxu0
    %v717 = vadd.f32 0.0, %v716
    %718 = vmatmul.f32.gmra.mxu0 %v676
    %v719 = vpop.f32.mrf.mxu0
    %v720 = vadd.f32 0.0, %v719
    %721 = vdwg.mxu0
    %vm722 = vcmask 64512
    %v723 = vsel %vm722, %v615, -inf
    %724 = vmax.xlane.f32.xlu0 %v723
    %v725 = vpop.xlane.xlu0 %724
    %v726 = vsel %vm722, %v618, -inf
    %727 = vmax.xlane.f32.xlu0 %v726
    %v728 = vpop.xlane.xlu0 %727
    %v729 = vsel %vm722, %v621, -inf
    %730 = vmax.xlane.f32.xlu0 %v729
    %v731 = vpop.xlane.xlu0 %730
    %v732 = vsel %vm722, %v624, -inf
    %733 = vmax.xlane.f32.xlu0 %v732
    %v734 = vpop.xlane.xlu0 %733
    %v735 = vsel %vm722, %v627, -inf
    %736 = vmax.xlane.f32.xlu0 %v735
    %v737 = vpop.xlane.xlu0 %736
    %v738 = vsel %vm722, %v630, -inf
    %739 = vmax.xlane.f32.xlu0 %v738
    %v740 = vpop.xlane.xlu0 %739
    %v741 = vsel %vm722, %v633, -inf
    %742 = vmax.xlane.f32.xlu0 %v741
    %v743 = vpop.xlane.xlu0 %742
    %v744 = vsel %vm722, %v636, -inf
    %745 = vmax.xlane.f32.xlu0 %v744
    %v746 = vpop.xlane.xlu0 %745
    %v747 = vsel %vm722, %v699, -inf
    %748 = vmax.xlane.f32.xlu0 %v747
    %v749 = vpop.xlane.xlu0 %748
    %v750 = vsel %vm722, %v702, -inf
    %751 = vmax.xlane.f32.xlu0 %v750
    %v752 = vpop.xlane.xlu0 %751
    %v753 = vsel %vm722, %v705, -inf
    %754 = vmax.xlane.f32.xlu0 %v753
    %v755 = vpop.xlane.xlu0 %754
    %v756 = vsel %vm722, %v708, -inf
    %757 = vmax.xlane.f32.xlu0 %v756
    %v758 = vpop.xlane.xlu0 %757
    %v759 = vsel %vm722, %v711, -inf
    %760 = vmax.xlane.f32.xlu0 %v759
    %v761 = vpop.xlane.xlu0 %760
    %v762 = vsel %vm722, %v714, -inf
    %763 = vmax.xlane.f32.xlu0 %v762
    %v764 = vpop.xlane.xlu0 %763
    %v765 = vsel %vm722, %v717, -inf
    %766 = vmax.xlane.f32.xlu0 %v765
    %v767 = vpop.xlane.xlu0 %766
    %v768 = vsel %vm722, %v720, -inf
    %769 = vmax.xlane.f32.xlu0 %v768
    %v770 = vpop.xlane.xlu0 %769
    %v771 = vsub.f32 %v615, %v725
    %v772 = vsub.f32 %v618, %v728
    %v773 = vsub.f32 %v621, %v731
    %v774 = vsub.f32 %v624, %v734
    %v775 = vsub.f32 %v627, %v737
    %v776 = vsub.f32 %v630, %v740
    %v777 = vsub.f32 %v633, %v743
    %v778 = vsub.f32 %v636, %v746
    %v779 = vsub.f32 %v699, %v749
    %v780 = vsub.f32 %v702, %v752
    %v781 = vsub.f32 %v705, %v755
    %v782 = vsub.f32 %v708, %v758
    %v783 = vsub.f32 %v711, %v761
    %v784 = vsub.f32 %v714, %v764
    %v785 = vsub.f32 %v717, %v767
    %v786 = vsub.f32 %v720, %v770
    %v787 = vmul.f32 %v771, 1.442695
    %v788 = vpow.pop %v787
    %v789 = vmul.f32 %v772, 1.442695
    %v790 = vpow.pop %v789
    %v791 = vmul.f32 %v773, 1.442695
    %v792 = vpow.pop %v791
    %v793 = vmul.f32 %v774, 1.442695
    %v794 = vpow.pop %v793
    %v795 = vmul.f32 %v775, 1.442695
    %v796 = vpow.pop %v795
    %v797 = vmul.f32 %v776, 1.442695
    %v798 = vpow.pop %v797
    %v799 = vmul.f32 %v777, 1.442695
    %v800 = vpow.pop %v799
    %v801 = vmul.f32 %v778, 1.442695
    %v802 = vpow.pop %v801
    %v803 = vmul.f32 %v779, 1.442695
    %v804 = vpow.pop %v803
    %v805 = vmul.f32 %v780, 1.442695
    %v806 = vpow.pop %v805
    %v807 = vmul.f32 %v781, 1.442695
    %v808 = vpow.pop %v807
    %v809 = vmul.f32 %v782, 1.442695
    %v810 = vpow.pop %v809
    %v811 = vmul.f32 %v783, 1.442695
    %v812 = vpow.pop %v811
    %v813 = vmul.f32 %v784, 1.442695
    %v814 = vpow.pop %v813
    %v815 = vmul.f32 %v785, 1.442695
    %v816 = vpow.pop %v815
    %v817 = vmul.f32 %v786, 1.442695
    %v818 = vpow.pop %v817
    %v819 = vsel %vm722, %v788, 0.0
    %820 = vadd.xlane.f32.xlu0 %v819
    %v821 = vpop.xlane.xlu0 %820
    %v822 = vsel %vm722, %v790, 0.0
    %823 = vadd.xlane.f32.xlu0 %v822
    %v824 = vpop.xlane.xlu0 %823
    %v825 = vsel %vm722, %v792, 0.0
    %826 = vadd.xlane.f32.xlu0 %v825
    %v827 = vpop.xlane.xlu0 %826
    %v828 = vsel %vm722, %v794, 0.0
    %829 = vadd.xlane.f32.xlu0 %v828
    %v830 = vpop.xlane.xlu0 %829
    %v831 = vsel %vm722, %v796, 0.0
    %832 = vadd.xlane.f32.xlu0 %v831
    %v833 = vpop.xlane.xlu0 %832
    %v834 = vsel %vm722, %v798, 0.0
    %835 = vadd.xlane.f32.xlu0 %v834
    %v836 = vpop.xlane.xlu0 %835
    %v837 = vsel %vm722, %v800, 0.0
    %838 = vadd.xlane.f32.xlu0 %v837
    %v839 = vpop.xlane.xlu0 %838
    %v840 = vsel %vm722, %v802, 0.0
    %841 = vadd.xlane.f32.xlu0 %v840
    %v842 = vpop.xlane.xlu0 %841
    %v843 = vsel %vm722, %v804, 0.0
    %844 = vadd.xlane.f32.xlu0 %v843
    %v845 = vpop.xlane.xlu0 %844
    %v846 = vsel %vm722, %v806, 0.0
    %847 = vadd.xlane.f32.xlu0 %v846
    %v848 = vpop.xlane.xlu0 %847
    %v849 = vsel %vm722, %v808, 0.0
    %850 = vadd.xlane.f32.xlu0 %v849
    %v851 = vpop.xlane.xlu0 %850
    %v852 = vsel %vm722, %v810, 0.0
    %853 = vadd.xlane.f32.xlu0 %v852
    %v854 = vpop.xlane.xlu0 %853
    %v855 = vsel %vm722, %v812, 0.0
    %856 = vadd.xlane.f32.xlu0 %v855
    %v857 = vpop.xlane.xlu0 %856
    %v858 = vsel %vm722, %v814, 0.0
    %859 = vadd.xlane.f32.xlu0 %v858
    %v860 = vpop.xlane.xlu0 %859
    %v861 = vsel %vm722, %v816, 0.0
    %862 = vadd.xlane.f32.xlu0 %v861
    %v863 = vpop.xlane.xlu0 %862
    %v864 = vsel %vm722, %v818, 0.0
    %865 = vadd.xlane.f32.xlu0 %v864
    %v866 = vpop.xlane.xlu0 %865
    %v867 = vrcp.pop %v821
    %v868 = vmul.f32 %v821, %v867
    %v869 = vsub.f32 1.0, %v868
    %v870 = vmul.f32 %v867, %v869
    %v871 = vadd.f32 %v867, %v870
    %vm872 = vweird.f32 %v821
    %vm873 = vweird.f32 %v867
    %vm874 = vmor %vm872, %vm873
    %v875 = vsel %vm874, %v867, %v871
    %v876 = vand.u32 2147483647, %v821
    %vm877 = vcmp.eq.f32.partialorder %v876, 8.507059e+37
    %v878 = vand.u32 %v821, 2147483648
    %v879 = vor.u32 1.1754944e-38, %v878
    %v880 = vsel %vm877, %v879, %v875
    %v881 = vrcp.pop %v824
    %v882 = vmul.f32 %v824, %v881
    %v883 = vsub.f32 1.0, %v882
    %v884 = vmul.f32 %v881, %v883
    %v885 = vadd.f32 %v881, %v884
    %vm886 = vweird.f32 %v824
    %vm887 = vweird.f32 %v881
    %vm888 = vmor %vm886, %vm887
    %v889 = vsel %vm888, %v881, %v885
    %v890 = vand.u32 2147483647, %v824
    %vm891 = vcmp.eq.f32.partialorder %v890, 8.507059e+37
    %v892 = vand.u32 %v824, 2147483648
    %v893 = vor.u32 1.1754944e-38, %v892
    %v894 = vsel %vm891, %v893, %v889
    %v895 = vrcp.pop %v827
    %v896 = vmul.f32 %v827, %v895
    %v897 = vsub.f32 1.0, %v896
    %v898 = vmul.f32 %v895, %v897
    %v899 = vadd.f32 %v895, %v898
    %vm900 = vweird.f32 %v827
    %vm901 = vweird.f32 %v895
    %vm902 = vmor %vm900, %vm901
    %v903 = vsel %vm902, %v895, %v899
    %v904 = vand.u32 2147483647, %v827
    %vm905 = vcmp.eq.f32.partialorder %v904, 8.507059e+37
    %v906 = vand.u32 %v827, 2147483648
    %v907 = vor.u32 1.1754944e-38, %v906
    %v908 = vsel %vm905, %v907, %v903
    %v909 = vrcp.pop %v830
    %v910 = vmul.f32 %v830, %v909
    %v911 = vsub.f32 1.0, %v910
    %v912 = vmul.f32 %v909, %v911
    %v913 = vadd.f32 %v909, %v912
    %vm914 = vweird.f32 %v830
    %vm915 = vweird.f32 %v909
    %vm916 = vmor %vm914, %vm915
    %v917 = vsel %vm916, %v909, %v913
    %v918 = vand.u32 2147483647, %v830
    %vm919 = vcmp.eq.f32.partialorder %v918, 8.507059e+37
    %v920 = vand.u32 %v830, 2147483648
    %v921 = vor.u32 1.1754944e-38, %v920
    %v922 = vsel %vm919, %v921, %v917
    %v923 = vrcp.pop %v833
    %v924 = vmul.f32 %v833, %v923
    %v925 = vsub.f32 1.0, %v924
    %v926 = vmul.f32 %v923, %v925
    %v927 = vadd.f32 %v923, %v926
    %vm928 = vweird.f32 %v833
    %vm929 = vweird.f32 %v923
    %vm930 = vmor %vm928, %vm929
    %v931 = vsel %vm930, %v923, %v927
    %v932 = vand.u32 2147483647, %v833
    %vm933 = vcmp.eq.f32.partialorder %v932, 8.507059e+37
    %v934 = vand.u32 %v833, 2147483648
    %v935 = vor.u32 1.1754944e-38, %v934
    %v936 = vsel %vm933, %v935, %v931
    %v937 = vrcp.pop %v836
    %v938 = vmul.f32 %v836, %v937
    %v939 = vsub.f32 1.0, %v938
    %v940 = vmul.f32 %v937, %v939
    %v941 = vadd.f32 %v937, %v940
    %vm942 = vweird.f32 %v836
    %vm943 = vweird.f32 %v937
    %vm944 = vmor %vm942, %vm943
    %v945 = vsel %vm944, %v937, %v941
    %v946 = vand.u32 2147483647, %v836
    %vm947 = vcmp.eq.f32.partialorder %v946, 8.507059e+37
    %v948 = vand.u32 %v836, 2147483648
    %v949 = vor.u32 1.1754944e-38, %v948
    %v950 = vsel %vm947, %v949, %v945
    %v951 = vrcp.pop %v839
    %v952 = vmul.f32 %v839, %v951
    %v953 = vsub.f32 1.0, %v952
    %v954 = vmul.f32 %v951, %v953
    %v955 = vadd.f32 %v951, %v954
    %vm956 = vweird.f32 %v839
    %vm957 = vweird.f32 %v951
    %vm958 = vmor %vm956, %vm957
    %v959 = vsel %vm958, %v951, %v955
    %v960 = vand.u32 2147483647, %v839
    %vm961 = vcmp.eq.f32.partialorder %v960, 8.507059e+37
    %v962 = vand.u32 %v839, 2147483648
    %v963 = vor.u32 1.1754944e-38, %v962
    %v964 = vsel %vm961, %v963, %v959
    %v965 = vrcp.pop %v842
    %v966 = vmul.f32 %v842, %v965
    %v967 = vsub.f32 1.0, %v966
    %v968 = vmul.f32 %v965, %v967
    %v969 = vadd.f32 %v965, %v968
    %vm970 = vweird.f32 %v842
    %vm971 = vweird.f32 %v965
    %vm972 = vmor %vm970, %vm971
    %v973 = vsel %vm972, %v965, %v969
    %v974 = vand.u32 2147483647, %v842
    %vm975 = vcmp.eq.f32.partialorder %v974, 8.507059e+37
    %v976 = vand.u32 %v842, 2147483648
    %v977 = vor.u32 1.1754944e-38, %v976
    %v978 = vsel %vm975, %v977, %v973
    %v979 = vrcp.pop %v845
    %v980 = vmul.f32 %v845, %v979
    %v981 = vsub.f32 1.0, %v980
    %v982 = vmul.f32 %v979, %v981
    %v983 = vadd.f32 %v979, %v982
    %vm984 = vweird.f32 %v845
    %vm985 = vweird.f32 %v979
    %vm986 = vmor %vm984, %vm985
    %v987 = vsel %vm986, %v979, %v983
    %v988 = vand.u32 2147483647, %v845
    %vm989 = vcmp.eq.f32.partialorder %v988, 8.507059e+37
    %v990 = vand.u32 %v845, 2147483648
    %v991 = vor.u32 1.1754944e-38, %v990
    %v992 = vsel %vm989, %v991, %v987
    %v993 = vrcp.pop %v848
    %v994 = vmul.f32 %v848, %v993
    %v995 = vsub.f32 1.0, %v994
    %v996 = vmul.f32 %v993, %v995
    %v997 = vadd.f32 %v993, %v996
    %vm998 = vweird.f32 %v848
    %vm999 = vweird.f32 %v993
    %vm1000 = vmor %vm998, %vm999
    %v1001 = vsel %vm1000, %v993, %v997
    %v1002 = vand.u32 2147483647, %v848
    %vm1003 = vcmp.eq.f32.partialorder %v1002, 8.507059e+37
    %v1004 = vand.u32 %v848, 2147483648
    %v1005 = vor.u32 1.1754944e-38, %v1004
    %v1006 = vsel %vm1003, %v1005, %v1001
    %v1007 = vrcp.pop %v851
    %v1008 = vmul.f32 %v851, %v1007
    %v1009 = vsub.f32 1.0, %v1008
    %v1010 = vmul.f32 %v1007, %v1009
    %v1011 = vadd.f32 %v1007, %v1010
    %vm1012 = vweird.f32 %v851
    %vm1013 = vweird.f32 %v1007
    %vm1014 = vmor %vm1012, %vm1013
    %v1015 = vsel %vm1014, %v1007, %v1011
    %v1016 = vand.u32 2147483647, %v851
    %vm1017 = vcmp.eq.f32.partialorder %v1016, 8.507059e+37
    %v1018 = vand.u32 %v851, 2147483648
    %v1019 = vor.u32 1.1754944e-38, %v1018
    %v1020 = vsel %vm1017, %v1019, %v1015
    %v1021 = vrcp.pop %v854
    %v1022 = vmul.f32 %v854, %v1021
    %v1023 = vsub.f32 1.0, %v1022
    %v1024 = vmul.f32 %v1021, %v1023
    %v1025 = vadd.f32 %v1021, %v1024
    %vm1026 = vweird.f32 %v854
    %vm1027 = vweird.f32 %v1021
    %vm1028 = vmor %vm1026, %vm1027
    %v1029 = vsel %vm1028, %v1021, %v1025
    %v1030 = vand.u32 2147483647, %v854
    %vm1031 = vcmp.eq.f32.partialorder %v1030, 8.507059e+37
    %v1032 = vand.u32 %v854, 2147483648
    %v1033 = vor.u32 1.1754944e-38, %v1032
    %v1034 = vsel %vm1031, %v1033, %v1029
    %v1035 = vrcp.pop %v857
    %v1036 = vmul.f32 %v857, %v1035
    %v1037 = vsub.f32 1.0, %v1036
    %v1038 = vmul.f32 %v1035, %v1037
    %v1039 = vadd.f32 %v1035, %v1038
    %vm1040 = vweird.f32 %v857
    %vm1041 = vweird.f32 %v1035
    %vm1042 = vmor %vm1040, %vm1041
    %v1043 = vsel %vm1042, %v1035, %v1039
    %v1044 = vand.u32 2147483647, %v857
    %vm1045 = vcmp.eq.f32.partialorder %v1044, 8.507059e+37
    %v1046 = vand.u32 %v857, 2147483648
    %v1047 = vor.u32 1.1754944e-38, %v1046
    %v1048 = vsel %vm1045, %v1047, %v1043
    %v1049 = vrcp.pop %v860
    %v1050 = vmul.f32 %v860, %v1049
    %v1051 = vsub.f32 1.0, %v1050
    %v1052 = vmul.f32 %v1049, %v1051
    %v1053 = vadd.f32 %v1049, %v1052
    %vm1054 = vweird.f32 %v860
    %vm1055 = vweird.f32 %v1049
    %vm1056 = vmor %vm1054, %vm1055
    %v1057 = vsel %vm1056, %v1049, %v1053
    %v1058 = vand.u32 2147483647, %v860
    %vm1059 = vcmp.eq.f32.partialorder %v1058, 8.507059e+37
    %v1060 = vand.u32 %v860, 2147483648
    %v1061 = vor.u32 1.1754944e-38, %v1060
    %v1062 = vsel %vm1059, %v1061, %v1057
    %v1063 = vrcp.pop %v863
    %v1064 = vmul.f32 %v863, %v1063
    %v1065 = vsub.f32 1.0, %v1064
    %v1066 = vmul.f32 %v1063, %v1065
    %v1067 = vadd.f32 %v1063, %v1066
    %vm1068 = vweird.f32 %v863
    %vm1069 = vweird.f32 %v1063
    %vm1070 = vmor %vm1068, %vm1069
    %v1071 = vsel %vm1070, %v1063, %v1067
    %v1072 = vand.u32 2147483647, %v863
    %vm1073 = vcmp.eq.f32.partialorder %v1072, 8.507059e+37
    %v1074 = vand.u32 %v863, 2147483648
    %v1075 = vor.u32 1.1754944e-38, %v1074
    %v1076 = vsel %vm1073, %v1075, %v1071
    %v1077 = vrcp.pop %v866
    %v1078 = vmul.f32 %v866, %v1077
    %v1079 = vsub.f32 1.0, %v1078
    %v1080 = vmul.f32 %v1077, %v1079
    %v1081 = vadd.f32 %v1077, %v1080
    %vm1082 = vweird.f32 %v866
    %vm1083 = vweird.f32 %v1077
    %vm1084 = vmor %vm1082, %vm1083
    %v1085 = vsel %vm1084, %v1077, %v1081
    %v1086 = vand.u32 2147483647, %v866
    %vm1087 = vcmp.eq.f32.partialorder %v1086, 8.507059e+37
    %v1088 = vand.u32 %v866, 2147483648
    %v1089 = vor.u32 1.1754944e-38, %v1088
    %v1090 = vsel %vm1087, %v1089, %v1085
    %v1091 = vmul.f32 %v788, %v880
    %v1092 = vmul.f32 %v790, %v894
    %v1093 = vmul.f32 %v792, %v908
    %v1094 = vmul.f32 %v794, %v922
    %v1095 = vmul.f32 %v796, %v936
    %v1096 = vmul.f32 %v798, %v950
    %v1097 = vmul.f32 %v800, %v964
    %v1098 = vmul.f32 %v802, %v978
    %v1099 = vmul.f32 %v804, %v992
    %v1100 = vmul.f32 %v806, %v1006
    %v1101 = vmul.f32 %v808, %v1020
    %v1102 = vmul.f32 %v810, %v1034
    %v1103 = vmul.f32 %v812, %v1048
    %v1104 = vmul.f32 %v814, %v1062
    %v1105 = vmul.f32 %v816, %v1076
    %v1106 = vmul.f32 %v818, %v1090
    %1107 = vrot.lane.b32.xlu0 %v517, 96
    %v1108 = vpop.permute.xlu0 %1107
    %v1111 = vsel %vm722, %v1091, 0
    %v1114 = vsel %vm722, %v1092, 0
    %v1117 = vsel %vm722, %v1093, 0
    %v1120 = vsel %vm722, %v1094, 0
    %v1123 = vsel %vm722, %v1095, 0
    %v1126 = vsel %vm722, %v1096, 0
    %v1129 = vsel %vm722, %v1097, 0
    %v1132 = vsel %vm722, %v1098, 0
    %1134 = vmatpush.msra.mxu0 0.0
    %1135 = vmatpush.msra.mxu0 0.0
    %1136 = vmatpush.msra.mxu0 0.0
    %1137 = vmatpush.msra.mxu0 0.0
    %1138 = vmatpush.msra.mxu0 0.0
    %1139 = vmatpush.msra.mxu0 0.0
    %1140 = vmatpush.msra.mxu0 0.0
    %1141 = vmatpush.msra.mxu0 0.0
    %1142 = vmatpush.msra.mxu0 0.0
    %1143 = vmatpush.msra.mxu0 0.0
    %1144 = vmatpush.msra.mxu0 0.0
    %1145 = vmatpush.msra.mxu0 0.0
    %1146 = vmatpush.msra.mxu0 0.0
    %1147 = vmatpush.msra.mxu0 0.0
    %1148 = vmatpush.msra.mxu0 0.0
    %1149 = vmatpush.msra.mxu0 %v1108
    %1150 = vmatmul.f32.gmra.mxu0 %v1111
    %v1151 = vpop.f32.mrf.mxu0
    %v1152 = vadd.f32 0.0, %v1151
    %1153 = vmatmul.f32.gmra.mxu0 %v1114
    %v1154 = vpop.f32.mrf.mxu0
    %v1155 = vadd.f32 0.0, %v1154
    %1156 = vmatmul.f32.gmra.mxu0 %v1117
    %v1157 = vpop.f32.mrf.mxu0
    %v1158 = vadd.f32 0.0, %v1157
    %1159 = vmatmul.f32.gmra.mxu0 %v1120
    %v1160 = vpop.f32.mrf.mxu0
    %v1161 = vadd.f32 0.0, %v1160
    %1162 = vmatmul.f32.gmra.mxu0 %v1123
    %v1163 = vpop.f32.mrf.mxu0
    %v1164 = vadd.f32 0.0, %v1163
    %1165 = vmatmul.f32.gmra.mxu0 %v1126
    %v1166 = vpop.f32.mrf.mxu0
    %v1167 = vadd.f32 0.0, %v1166
    %1168 = vmatmul.f32.gmra.mxu0 %v1129
    %v1169 = vpop.f32.mrf.mxu0
    %v1170 = vadd.f32 0.0, %v1169
    %1171 = vmatmul.f32.gmra.mxu0 %v1132
    %v1172 = vpop.f32.mrf.mxu0
    %v1173 = vadd.f32 0.0, %v1172
    %1174 = vdwg.mxu0
    %1175 = vrot.lane.b32.xlu0 %v520, 96
    %v1176 = vpop.permute.xlu0 %1175
    %v1179 = vsel %vm722, %v1099, 0
    %v1182 = vsel %vm722, %v1100, 0
    %v1185 = vsel %vm722, %v1101, 0
    %v1188 = vsel %vm722, %v1102, 0
    %v1191 = vsel %vm722, %v1103, 0
    %v1194 = vsel %vm722, %v1104, 0
    %v1197 = vsel %vm722, %v1105, 0
    %v1200 = vsel %vm722, %v1106, 0
    %1202 = vmatpush.msra.mxu0 0.0
    %1203 = vmatpush.msra.mxu0 0.0
    %1204 = vmatpush.msra.mxu0 0.0
    %1205 = vmatpush.msra.mxu0 0.0
    %1206 = vmatpush.msra.mxu0 0.0
    %1207 = vmatpush.msra.mxu0 0.0
    %1208 = vmatpush.msra.mxu0 0.0
    %1209 = vmatpush.msra.mxu0 0.0
    %1210 = vmatpush.msra.mxu0 0.0
    %1211 = vmatpush.msra.mxu0 0.0
    %1212 = vmatpush.msra.mxu0 0.0
    %1213 = vmatpush.msra.mxu0 0.0
    %1214 = vmatpush.msra.mxu0 0.0
    %1215 = vmatpush.msra.mxu0 0.0
    %1216 = vmatpush.msra.mxu0 0.0
    %1217 = vmatpush.msra.mxu0 %v1176
    %1218 = vmatmul.f32.gmra.mxu0 %v1179
    %v1219 = vpop.f32.mrf.mxu0
    %v1220 = vadd.f32 0.0, %v1219
    %1221 = vmatmul.f32.gmra.mxu0 %v1182
    %v1222 = vpop.f32.mrf.mxu0
    %v1223 = vadd.f32 0.0, %v1222
    %1224 = vmatmul.f32.gmra.mxu0 %v1185
    %v1225 = vpop.f32.mrf.mxu0
    %v1226 = vadd.f32 0.0, %v1225
    %1227 = vmatmul.f32.gmra.mxu0 %v1188
    %v1228 = vpop.f32.mrf.mxu0
    %v1229 = vadd.f32 0.0, %v1228
    %1230 = vmatmul.f32.gmra.mxu0 %v1191
    %v1231 = vpop.f32.mrf.mxu0
    %v1232 = vadd.f32 0.0, %v1231
    %1233 = vmatmul.f32.gmra.mxu0 %v1194
    %v1234 = vpop.f32.mrf.mxu0
    %v1235 = vadd.f32 0.0, %v1234
    %1236 = vmatmul.f32.gmra.mxu0 %v1197
    %v1237 = vpop.f32.mrf.mxu0
    %v1238 = vadd.f32 0.0, %v1237
    %1239 = vmatmul.f32.gmra.mxu0 %v1200
    %v1240 = vpop.f32.mrf.mxu0
    %v1241 = vadd.f32 0.0, %v1240
    %1242 = vdwg.mxu0
    %v1243 = vmul.f32 %v1152, %v24
    %v1244 = vmul.f32 %v1155, %v24
    %v1245 = vmul.f32 %v1220, %v24
    %v1246 = vmul.f32 %v1223, %v24
    %v1247 = vmul.f32 %v1158, %v29
    %v1248 = vmul.f32 %v1161, %v29
    %v1249 = vmul.f32 %v1226, %v29
    %v1250 = vmul.f32 %v1229, %v29
    %v1251 = vadd.f32 %v1243, %v1247
    %v1252 = vadd.f32 %v1244, %v1248
    %v1253 = vadd.f32 %v1245, %v1249
    %v1254 = vadd.f32 %v1246, %v1250
    %v1255 = vmul.f32 %v1164, %v34
    %v1256 = vmul.f32 %v1167, %v34
    %v1257 = vmul.f32 %v1232, %v34
    %v1258 = vmul.f32 %v1235, %v34
    %v1259 = vadd.f32 %v1251, %v1255
    %v1260 = vadd.f32 %v1252, %v1256
    %v1261 = vadd.f32 %v1253, %v1257
    %v1262 = vadd.f32 %v1254, %v1258
    %v1263 = vmul.f32 %v1170, %v39
    %v1264 = vmul.f32 %v1173, %v39
    %v1265 = vmul.f32 %v1238, %v39
    %v1266 = vmul.f32 %v1241, %v39
    %v1267 = vadd.f32 %v1259, %v1263
    %v1268 = vadd.f32 %v1260, %v1264
    %v1269 = vadd.f32 %v1261, %v1265
    %v1270 = vadd.f32 %v1262, %v1266
    %1271 = vrot.lane.b32.xlu0 %v40, 32
    %v1272 = vpop.permute.xlu0 %1271
    %1273 = vrot.lane.b32.xlu0 %v41, 32
    %v1274 = vpop.permute.xlu0 %1273
    %1275 = vrot.lane.b32.xlu0 %v42, 32
    %v1276 = vpop.permute.xlu0 %1275
    %1277 = vrot.lane.b32.xlu0 %v43, 32
    %v1278 = vpop.permute.xlu0 %1277
    %1283 = vrot.lane.b32.xlu0 %v479, 64
    %v1284 = vpop.permute.xlu0 %1283
    %v1287 = vsel %vm53, %v1267, 0
    %v1290 = vsel %vm53, %v1268, 0
    %v1293 = vsel %vm53, %v1269, 0
    %v1296 = vsel %vm53, %v1270, 0
    %1298 = vmatpush.msra.mxu0 0.0
    %1299 = vmatpush.msra.mxu0 0.0
    %1300 = vmatpush.msra.mxu0 0.0
    %1301 = vmatpush.msra.mxu0 0.0
    %1302 = vmatpush.msra.mxu0 0.0
    %1303 = vmatpush.msra.mxu0 0.0
    %1304 = vmatpush.msra.mxu0 0.0
    %1305 = vmatpush.msra.mxu0 0.0
    %1306 = vmatpush.msra.mxu0 0.0
    %1307 = vmatpush.msra.mxu0 0.0
    %1308 = vmatpush.msra.mxu0 0.0
    %1309 = vmatpush.msra.mxu0 0.0
    %1310 = vmatpush.msra.mxu0 %v1278
    %1311 = vmatpush.msra.mxu0 %v1276
    %1312 = vmatpush.msra.mxu0 %v1274
    %1313 = vmatpush.msra.mxu0 %v1272
    %1314 = vmatmul.f32.gmra.mxu0 %v1287
    %v1315 = vpop.f32.mrf.mxu0
    %v1316 = vadd.f32 %v1284, %v1315
    %1317 = vmatmul.f32.gmra.mxu0 %v1290
    %v1318 = vpop.f32.mrf.mxu0
    %v1319 = vadd.f32 %v1284, %v1318
    %1320 = vmatmul.f32.gmra.mxu0 %v1293
    %v1321 = vpop.f32.mrf.mxu0
    %v1322 = vadd.f32 %v1284, %v1321
    %1323 = vmatmul.f32.gmra.mxu0 %v1296
    %v1324 = vpop.f32.mrf.mxu0
    %v1325 = vadd.f32 %v1284, %v1324
    %1326 = vdwg.mxu0
    %1327 = vst.msk [vmem:[#allocation2] sm:$0xff] %vm53, %v1316
    %1328 = vst.msk [vmem:[#allocation2 + $0x8] sm:$0xff] %vm53, %v1319
    %1329 = vst.msk [vmem:[#allocation2 + $0x10] sm:$0xff] %vm53, %v1322
    %1330 = vst.msk [vmem:[#allocation2 + $0x18] sm:$0xff] %vm53, %v1325
    // Predicated region
    $region18: #{isab_forward.1} parent=1 // pred_check
      _
    $region19: #{isab_forward.1} parent=1 // pred_check_branch
      %1332 = sbr.rel (0) target = $region21
    $region20: #{isab_forward.1} parent=1 // pred_region
      %1334 = vsyncadd [#allocation3], 0
      %s1335 = sshll.u32 [#allocation2], 4
      %s1336 = int_to_ptr.vmem [resolvable:$true] %s1335
      %s1337 = sshll.u32 %s4, 4
      %s1338 = int_to_ptr.hbm [resolvable:$true] %s1337
      %1343 = dma.vmem_to_hbm [thread:$0]  %s1336, 512, %s1338, [#allocation3], 128, 128, 8
    $region21: #{isab_forward.1} parent=1 // pred_fallthru
      _
    // Predicated region
    $region22: #{isab_forward.1} parent=1 // pred_check
      _
    $region23: #{isab_forward.1} parent=1 // pred_check_branch
      %1345 = sbr.rel (0) target = $region25
    $region24: #{isab_forward.1} parent=1 // pred_region
      %1347 = dma.done [#allocation3], 512
    $region25: #{isab_forward.1} parent=1 // pred_fallthru
      _
    %1348 = vsyncpa [#allocation3], 1

</llo_original>
